<compile_context>
chip_gen: v7x
topology: tpu7x:2x2x1
jax: 0.10.0
libtpu: 0.0.40
codegen_flags: <defaults>
</compile_context>

<pallas_src>
import jax
import jax.numpy as jnp
from jax.experimental import pallas as pl
from jax.experimental.pallas import tpu as pltpu


# ----------------------------- Pallas kernel ------------------------------- #

def nli_fused_kernel(x_ref, len_ref, wih_ref, whh_ref, b_ref,
                     w1_ref, b1_ref, wo_ref, bo_ref,
                     out_ref, gproj_ref, cat_ref):
    """Fused siamese-LSTM + classifier head.

    x_ref    : (T*B2, E)  embedded tokens, premise||hypothesis stacked in batch
    len_ref  : (B2, 1)    int32 sequence lengths
    wih_ref  : (E, 4H)    W_ih^T
    whh_ref  : (H, 4H)    W_hh^T
    b_ref    : (1, 4H)    b_ih + b_hh
    w1_ref   : (4H, H)    fc1.weight^T
    b1_ref   : (1, H)     fc1.bias
    wo_ref   : (H, L)     out.weight^T
    bo_ref   : (1, L)     out.bias
    out_ref  : (B, L)     logits
    gproj_ref: (T*B2, 4H) scratch: hoisted input projection
    cat_ref  : (B, 4H)    scratch: [p, h, p-h, p*h]
    """
    B2 = len_ref.shape[0]
    B = B2 // 2
    T = x_ref.shape[0] // B2
    H = whh_ref.shape[0]

    # Hoisted input projection + bias: one big matmul, outside the serial chain.
    gproj_ref[...] = (
        jnp.dot(x_ref[...], wih_ref[...], preferred_element_type=jnp.float32)
        + b_ref[...])

    lens = len_ref[...]                      # (B2, 1) int32
    whh = whh_ref[...]                       # (H, 4H)

    h = jnp.zeros((B2, H), jnp.float32)
    c = jnp.zeros((B2, H), jnp.float32)

    # Statically unrolled recurrence (T is small and compile-time constant).
    for t in range(T):
        gates = (gproj_ref[t * B2:(t + 1) * B2, :]
                 + jnp.dot(h, whh, preferred_element_type=jnp.float32))
        # Full 4H-wide transcendentals, then slice (PyTorch gate order i,f,g,o).
        sig = jax.nn.sigmoid(gates)
        tnh = jnp.tanh(gates)
        i_g = sig[:, 0:H]
        f_g = sig[:, H:2 * H]
        g_g = tnh[:, 2 * H:3 * H]
        o_g = sig[:, 3 * H:4 * H]
        c_new = f_g * c + i_g * g_g
        h_new = o_g * jnp.tanh(c_new)
        valid = t < lens                     # (B2, 1): packed-sequence freeze
        h = jnp.where(valid, h_new, h)
        c = jnp.where(valid, c_new, c)

    p = h[0:B, :]
    hy = h[B:B2, :]

    # Assemble cat([p, h, p-h, p*h]) in VMEM -> single K=4H matmul for fc1.
    cat_ref[:, 0:H] = p
    cat_ref[:, H:2 * H] = hy
    cat_ref[:, 2 * H:3 * H] = p - hy
    cat_ref[:, 3 * H:4 * H] = p * hy

    z = jnp.tanh(
        jnp.dot(cat_ref[...], w1_ref[...], preferred_element_type=jnp.float32)
        + b1_ref[...])
    out_ref[...] = (jnp.dot(z, wo_ref[...], preferred_element_type=jnp.float32)
                    + bo_ref[...])


# ------------------------------ Python wrapper ------------------------------ #

def fused_forward(x_flat, lengths, params):
    """x_flat: (T*B2, E) embedded stacked input; lengths: (B2, 1) int32."""
    B2 = lengths.shape[0]
    B = B2 // 2
    E = x_flat.shape[1]
    H = params["whh_t"].shape[0]
    L = params["wo_t"].shape[1]
    TB2 = x_flat.shape[0]

    return pl.pallas_call(
        nli_fused_kernel,
        grid=(1,),
        in_specs=[
            pl.BlockSpec((TB2, E), lambda i: (0, 0)),
            pl.BlockSpec((B2, 1), lambda i: (0, 0)),
            pl.BlockSpec((E, 4 * H), lambda i: (0, 0)),
            pl.BlockSpec((H, 4 * H), lambda i: (0, 0)),
            pl.BlockSpec((1, 4 * H), lambda i: (0, 0)),
            pl.BlockSpec((4 * H, H), lambda i: (0, 0)),
            pl.BlockSpec((1, H), lambda i: (0, 0)),
            pl.BlockSpec((H, L), lambda i: (0, 0)),
            pl.BlockSpec((1, L), lambda i: (0, 0)),
        ],
        out_specs=pl.BlockSpec((B, L), lambda i: (0, 0)),
        out_shape=jax.ShapeDtypeStruct((B, L), jnp.float32),
        scratch_shapes=[
            pltpu.VMEM((TB2, 4 * H), jnp.float32),   # hoisted input projection
            pltpu.VMEM((B, 4 * H), jnp.float32),     # head concat
        ],
    )(x_flat, lengths, params["wih_t"], params["whh_t"], params["b_lstm"],
      params["w1_t"], params["b1"], params["wo_t"], params["bo"])


def model_forward(params, premise_idx, premise_len, hyp_idx, hyp_len):
    """premise_idx / hyp_idx: (T, B) int32; *_len: (B, 1) int32."""
    T, B = premise_idx.shape
    # Single embedding gather over stacked indices (glue, plain XLA gather).
    idx_all = jnp.concatenate([premise_idx, hyp_idx], axis=1)      # (T, 2B)
    len_all = jnp.concatenate([premise_len, hyp_len], axis=0)      # (2B, 1)
    emb = jnp.take(params["embed"], idx_all, axis=0)               # (T, 2B, E)
    x_flat = emb.reshape(T * 2 * B, emb.shape[-1])                 # (T*2B, E)
    return fused_forward(x_flat, len_all, params)


# --------------------------- pure-JAX reference ----------------------------- #

def _ref_lstm(x, lengths, wih_t, whh_t, bias):
    T, B, _ = x.shape
    H = whh_t.shape[0]
    h = jnp.zeros((B, H), jnp.float32)
    c = jnp.zeros((B, H), jnp.float32)
    for t in range(T):
        gates = x[t] @ wih_t + h @ whh_t + bias
        i = jax.nn.sigmoid(gates[:, 0:H]); f = jax.nn.sigmoid(gates[:, H:2 * H])
        g = jnp.tanh(gates[:, 2 * H:3 * H]); o = jax.nn.sigmoid(gates[:, 3 * H:4 * H])
        c_new = f * c + i * g
        h_new = o * jnp.tanh(c_new)
        valid = (t < lengths)[:, None]
        h = jnp.where(valid, h_new, h)
        c = jnp.where(valid, c_new, c)
    return h


def _ref_forward(params, p_idx, p_len, h_idx, h_len):
    emb_p = jnp.take(params["embed"], p_idx, axis=0)
    emb_h = jnp.take(params["embed"], h_idx, axis=0)
    op = _ref_lstm(emb_p, p_len[:, 0], params["wih_t"], params["whh_t"],
                   params["b_lstm"])
    oh = _ref_lstm(emb_h, h_len[:, 0], params["wih_t"], params["whh_t"],
                   params["b_lstm"])
    cat = jnp.concatenate([op, oh, op - oh, op * oh], axis=1)
    z = jnp.tanh(cat @ params["w1_t"] + params["b1"])
    return z @ params["wo_t"] + params["bo"]


# ----------------------------------- main ----------------------------------- #

if __name__ == "__main__":
    VOCAB, EMB, HID, LABELS = 100, 32, 32, 3
    T, B = 8, 8

    key = jax.random.PRNGKey(0)
    ks = jax.random.split(key, 12)
    s = 1.0 / jnp.sqrt(jnp.float32(HID))

    params = {
        "embed": jax.random.normal(ks[0], (VOCAB, EMB), jnp.float32) * 0.1,
        "wih_t": jax.random.uniform(ks[1], (EMB, 4 * HID), jnp.float32, -s, s),
        "whh_t": jax.random.uniform(ks[2], (HID, 4 * HID), jnp.float32, -s, s),
        "b_lstm": (jax.random.uniform(ks[3], (1, 4 * HID), jnp.float32, -s, s)
                   + jax.random.uniform(ks[4], (1, 4 * HID), jnp.float32, -s, s)),
        "w1_t": jax.random.uniform(ks[5], (4 * HID, HID), jnp.float32, -s, s),
        "b1": jax.random.uniform(ks[6], (1, HID), jnp.float32, -s, s),
        "wo_t": jax.random.uniform(ks[7], (HID, LABELS), jnp.float32, -s, s),
        "bo": jax.random.uniform(ks[8], (1, LABELS), jnp.float32, -s, s),
    }

    premise_idx = jax.random.randint(ks[9], (T, B), 0, VOCAB, jnp.int32)
    hyp_idx = jax.random.randint(ks[10], (T, B), 0, VOCAB, jnp.int32)
    premise_len = jnp.array([8, 5, 3, 8, 2, 7, 6, 4], jnp.int32).reshape(B, 1)
    hyp_len = jnp.array([4, 8, 6, 2, 7, 3, 5, 8], jnp.int32).reshape(B, 1)

    logits = model_forward(params, premise_idx, premise_len, hyp_idx, hyp_len)
    logits = jax.block_until_ready(logits)

    ref = _ref_forward(params, premise_idx, premise_len, hyp_idx, hyp_len)
    assert logits.shape == (B, LABELS)
    assert jnp.allclose(logits, ref, atol=1e-3, rtol=1e-3), "mismatch vs reference"

    # TODO(synk): bidirectional / multi-layer LSTM variants (config.bidir, depth>1)
    # are not exercised; the PyTorch forward only consumes h[0] (layer-0 forward),
    # which is what this fused kernel reproduces.
    print("KERNEL_OK")
</pallas_src>

<mosaic_0001>
module attributes {stable_mosaic.version = 11 : i64} {
  func.func @nli_fused_kernel(%arg0: i32, %arg1: memref<128x32xf32, #tpu.memory_space<vmem>>, %arg2: memref<16x1xi32, #tpu.memory_space<vmem>>, %arg3: memref<32x128xf32, #tpu.memory_space<vmem>>, %arg4: memref<32x128xf32, #tpu.memory_space<vmem>>, %arg5: memref<1x128xf32, #tpu.memory_space<vmem>>, %arg6: memref<128x32xf32, #tpu.memory_space<vmem>>, %arg7: memref<1x32xf32, #tpu.memory_space<vmem>>, %arg8: memref<32x3xf32, #tpu.memory_space<vmem>>, %arg9: memref<1x3xf32, #tpu.memory_space<vmem>>, %arg10: memref<8x3xf32, #tpu.memory_space<vmem>>, %arg11: memref<128x128xf32, #tpu.memory_space<vmem>>, %arg12: memref<8x128xf32, #tpu.memory_space<vmem>>) attributes {dimension_semantics = [#tpu.dimension_semantics<arbitrary>], iteration_bounds = array<i64: 1>, scalar_prefetch = 0 : i64, scratch_operands = 2 : i64, tpu.core_type = #tpu.core_type<tc>, window_params = [{pipeline_mode = #tpu.pipeline_mode<synchronous>, transform_indices = @transform_0, window_bounds = array<i64: 128, 32>}, {pipeline_mode = #tpu.pipeline_mode<synchronous>, transform_indices = @transform_1, window_bounds = array<i64: 16, 1>}, {pipeline_mode = #tpu.pipeline_mode<synchronous>, transform_indices = @transform_2, window_bounds = array<i64: 32, 128>}, {pipeline_mode = #tpu.pipeline_mode<synchronous>, transform_indices = @transform_3, window_bounds = array<i64: 32, 128>}, {pipeline_mode = #tpu.pipeline_mode<synchronous>, transform_indices = @transform_4, window_bounds = array<i64: 1, 128>}, {pipeline_mode = #tpu.pipeline_mode<synchronous>, transform_indices = @transform_5, window_bounds = array<i64: 128, 32>}, {pipeline_mode = #tpu.pipeline_mode<synchronous>, transform_indices = @transform_6, window_bounds = array<i64: 1, 32>}, {pipeline_mode = #tpu.pipeline_mode<synchronous>, transform_indices = @transform_7, window_bounds = array<i64: 32, 3>}, {pipeline_mode = #tpu.pipeline_mode<synchronous>, transform_indices = @transform_8, window_bounds = array<i64: 1, 3>}, {pipeline_mode = #tpu.pipeline_mode<synchronous>, transform_indices = @transform_9, window_bounds = array<i64: 8, 3>}]} {
    %c0 = arith.constant 0 : index
    %c0_0 = arith.constant 0 : index
    %0 = vector.load %arg1[%c0, %c0_0] : memref<128x32xf32, #tpu.memory_space<vmem>>, vector<128x32xf32>
    %c0_1 = arith.constant 0 : index
    %c0_2 = arith.constant 0 : index
    %1 = vector.load %arg3[%c0_1, %c0_2] : memref<32x128xf32, #tpu.memory_space<vmem>>, vector<32x128xf32>
    %cst = arith.constant dense<0.000000e+00> : vector<128x128xf32>
    %2 = tpu.matmul %0, %1, %cst {dimension_numbers = #tpu.dot_dimension_numbers<[1], [0], [0], [1], [0, 0, 1, 1], [], []>} : vector<128x32xf32>, vector<32x128xf32>, vector<128x128xf32> -> vector<128x128xf32>
    %c0_3 = arith.constant 0 : index
    %c0_4 = arith.constant 0 : index
    %3 = vector.load %arg5[%c0_3, %c0_4] : memref<1x128xf32, #tpu.memory_space<vmem>>, vector<1x128xf32>
    %4 = vector.broadcast %3 : vector<1x128xf32> to vector<128x128xf32>
    %5 = arith.addf %2, %4 : vector<128x128xf32>
    %c0_5 = arith.constant 0 : index
    %c0_6 = arith.constant 0 : index
    %6 = vector.load %arg11[%c0_5, %c0_6] : memref<128x128xf32, #tpu.memory_space<vmem>>, vector<128x128xf32>
    tpu.vector_store %arg11[%c0_5, %c0_6], %5 {strides = array<i32>} : memref<128x128xf32, #tpu.memory_space<vmem>>, vector<128x128xf32>,
    %c0_7 = arith.constant 0 : index
    %c0_8 = arith.constant 0 : index
    %7 = vector.load %arg2[%c0_7, %c0_8] : memref<16x1xi32, #tpu.memory_space<vmem>>, vector<16x1xi32>
    %c0_9 = arith.constant 0 : index
    %c0_10 = arith.constant 0 : index
    %8 = vector.load %arg4[%c0_9, %c0_10] : memref<32x128xf32, #tpu.memory_space<vmem>>, vector<32x128xf32>
    %cst_11 = arith.constant 0.000000e+00 : f32
    %9 = vector.broadcast %cst_11 : f32 to vector<16x32xf32>
    %cst_12 = arith.constant 0.000000e+00 : f32
    %10 = vector.broadcast %cst_12 : f32 to vector<16x32xf32>
    %c0_13 = arith.constant 0 : index
    %c0_14 = arith.constant 0 : index
    %11 = vector.load %arg11[%c0_13, %c0_14] : memref<128x128xf32, #tpu.memory_space<vmem>>, vector<16x128xf32>
    %cst_15 = arith.constant dense<0.000000e+00> : vector<16x128xf32>
    %12 = tpu.matmul %9, %8, %cst_15 {dimension_numbers = #tpu.dot_dimension_numbers<[1], [0], [0], [1], [0, 0, 1, 1], [], []>} : vector<16x32xf32>, vector<32x128xf32>, vector<16x128xf32> -> vector<16x128xf32>
    %13 = arith.addf %11, %12 : vector<16x128xf32>
    %14 = arith.negf %13 : vector<16x128xf32>
    %15 = math.exp %14 : vector<16x128xf32>
    %cst_16 = arith.constant 1.000000e+00 : f32
    %16 = vector.broadcast %cst_16 : f32 to vector<16x128xf32>
    %17 = arith.addf %16, %15 : vector<16x128xf32>
    %18 = arith.divf %16, %17 : vector<16x128xf32>
    %19 = math.tanh %13 : vector<16x128xf32>
    %20 = vector.extract_strided_slice %18 {offsets = [0, 0], sizes = [16, 32], strides = [1, 1]} : vector<16x128xf32> to vector<16x32xf32>
    %21 = vector.extract_strided_slice %18 {offsets = [0, 32], sizes = [16, 32], strides = [1, 1]} : vector<16x128xf32> to vector<16x32xf32>
    %22 = vector.extract_strided_slice %19 {offsets = [0, 64], sizes = [16, 32], strides = [1, 1]} : vector<16x128xf32> to vector<16x32xf32>
    %23 = vector.extract_strided_slice %18 {offsets = [0, 96], sizes = [16, 32], strides = [1, 1]} : vector<16x128xf32> to vector<16x32xf32>
    %24 = arith.mulf %21, %10 : vector<16x32xf32>
    %25 = arith.mulf %20, %22 : vector<16x32xf32>
    %26 = arith.addf %24, %25 : vector<16x32xf32>
    %27 = math.tanh %26 : vector<16x32xf32>
    %28 = arith.mulf %23, %27 : vector<16x32xf32>
    %c0_i32 = arith.constant 0 : i32
    %29 = vector.broadcast %c0_i32 : i32 to vector<16x1xi32>
    %30 = arith.cmpi sgt, %7, %29 : vector<16x1xi32>
    %31 = vector.shape_cast %30 : vector<16x1xi1> to vector<16x1xi1>
    %32 = vector.broadcast %31 : vector<16x1xi1> to vector<16x32xi1>
    %33 = arith.select %32, %28, %9 : vector<16x32xi1>, vector<16x32xf32>
    %34 = vector.shape_cast %30 : vector<16x1xi1> to vector<16x1xi1>
    %35 = vector.broadcast %34 : vector<16x1xi1> to vector<16x32xi1>
    %36 = arith.select %35, %26, %10 : vector<16x32xi1>, vector<16x32xf32>
    %c16 = arith.constant 16 : index
    %c0_17 = arith.constant 0 : index
    %37 = vector.load %arg11[%c16, %c0_17] : memref<128x128xf32, #tpu.memory_space<vmem>>, vector<16x128xf32>
    %cst_18 = arith.constant dense<0.000000e+00> : vector<16x128xf32>
    %38 = tpu.matmul %33, %8, %cst_18 {dimension_numbers = #tpu.dot_dimension_numbers<[1], [0], [0], [1], [0, 0, 1, 1], [], []>} : vector<16x32xf32>, vector<32x128xf32>, vector<16x128xf32> -> vector<16x128xf32>
    %39 = arith.addf %37, %38 : vector<16x128xf32>
    %40 = arith.negf %39 : vector<16x128xf32>
    %41 = math.exp %40 : vector<16x128xf32>
    %cst_19 = arith.constant 1.000000e+00 : f32
    %42 = vector.broadcast %cst_19 : f32 to vector<16x128xf32>
    %43 = arith.addf %42, %41 : vector<16x128xf32>
    %44 = arith.divf %42, %43 : vector<16x128xf32>
    %45 = math.tanh %39 : vector<16x128xf32>
    %46 = vector.extract_strided_slice %44 {offsets = [0, 0], sizes = [16, 32], strides = [1, 1]} : vector<16x128xf32> to vector<16x32xf32>
    %47 = vector.extract_strided_slice %44 {offsets = [0, 32], sizes = [16, 32], strides = [1, 1]} : vector<16x128xf32> to vector<16x32xf32>
    %48 = vector.extract_strided_slice %45 {offsets = [0, 64], sizes = [16, 32], strides = [1, 1]} : vector<16x128xf32> to vector<16x32xf32>
    %49 = vector.extract_strided_slice %44 {offsets = [0, 96], sizes = [16, 32], strides = [1, 1]} : vector<16x128xf32> to vector<16x32xf32>
    %50 = arith.mulf %47, %36 : vector<16x32xf32>
    %51 = arith.mulf %46, %48 : vector<16x32xf32>
    %52 = arith.addf %50, %51 : vector<16x32xf32>
    %53 = math.tanh %52 : vector<16x32xf32>
    %54 = arith.mulf %49, %53 : vector<16x32xf32>
    %c1_i32 = arith.constant 1 : i32
    %55 = vector.broadcast %c1_i32 : i32 to vector<16x1xi32>
    %56 = arith.cmpi sgt, %7, %55 : vector<16x1xi32>
    %57 = vector.shape_cast %56 : vector<16x1xi1> to vector<16x1xi1>
    %58 = vector.broadcast %57 : vector<16x1xi1> to vector<16x32xi1>
    %59 = arith.select %58, %54, %33 : vector<16x32xi1>, vector<16x32xf32>
    %60 = vector.shape_cast %56 : vector<16x1xi1> to vector<16x1xi1>
    %61 = vector.broadcast %60 : vector<16x1xi1> to vector<16x32xi1>
    %62 = arith.select %61, %52, %36 : vector<16x32xi1>, vector<16x32xf32>
    %c32 = arith.constant 32 : index
    %c0_20 = arith.constant 0 : index
    %63 = vector.load %arg11[%c32, %c0_20] : memref<128x128xf32, #tpu.memory_space<vmem>>, vector<16x128xf32>
    %cst_21 = arith.constant dense<0.000000e+00> : vector<16x128xf32>
    %64 = tpu.matmul %59, %8, %cst_21 {dimension_numbers = #tpu.dot_dimension_numbers<[1], [0], [0], [1], [0, 0, 1, 1], [], []>} : vector<16x32xf32>, vector<32x128xf32>, vector<16x128xf32> -> vector<16x128xf32>
    %65 = arith.addf %63, %64 : vector<16x128xf32>
    %66 = arith.negf %65 : vector<16x128xf32>
    %67 = math.exp %66 : vector<16x128xf32>
    %cst_22 = arith.constant 1.000000e+00 : f32
    %68 = vector.broadcast %cst_22 : f32 to vector<16x128xf32>
    %69 = arith.addf %68, %67 : vector<16x128xf32>
    %70 = arith.divf %68, %69 : vector<16x128xf32>
    %71 = math.tanh %65 : vector<16x128xf32>
    %72 = vector.extract_strided_slice %70 {offsets = [0, 0], sizes = [16, 32], strides = [1, 1]} : vector<16x128xf32> to vector<16x32xf32>
    %73 = vector.extract_strided_slice %70 {offsets = [0, 32], sizes = [16, 32], strides = [1, 1]} : vector<16x128xf32> to vector<16x32xf32>
    %74 = vector.extract_strided_slice %71 {offsets = [0, 64], sizes = [16, 32], strides = [1, 1]} : vector<16x128xf32> to vector<16x32xf32>
    %75 = vector.extract_strided_slice %70 {offsets = [0, 96], sizes = [16, 32], strides = [1, 1]} : vector<16x128xf32> to vector<16x32xf32>
    %76 = arith.mulf %73, %62 : vector<16x32xf32>
    %77 = arith.mulf %72, %74 : vector<16x32xf32>
    %78 = arith.addf %76, %77 : vector<16x32xf32>
    %79 = math.tanh %78 : vector<16x32xf32>
    %80 = arith.mulf %75, %79 : vector<16x32xf32>
    %c2_i32 = arith.constant 2 : i32
    %81 = vector.broadcast %c2_i32 : i32 to vector<16x1xi32>
    %82 = arith.cmpi sgt, %7, %81 : vector<16x1xi32>
    %83 = vector.shape_cast %82 : vector<16x1xi1> to vector<16x1xi1>
    %84 = vector.broadcast %83 : vector<16x1xi1> to vector<16x32xi1>
    %85 = arith.select %84, %80, %59 : vector<16x32xi1>, vector<16x32xf32>
    %86 = vector.shape_cast %82 : vector<16x1xi1> to vector<16x1xi1>
    %87 = vector.broadcast %86 : vector<16x1xi1> to vector<16x32xi1>
    %88 = arith.select %87, %78, %62 : vector<16x32xi1>, vector<16x32xf32>
    %c48 = arith.constant 48 : index
    %c0_23 = arith.constant 0 : index
    %89 = vector.load %arg11[%c48, %c0_23] : memref<128x128xf32, #tpu.memory_space<vmem>>, vector<16x128xf32>
    %cst_24 = arith.constant dense<0.000000e+00> : vector<16x128xf32>
    %90 = tpu.matmul %85, %8, %cst_24 {dimension_numbers = #tpu.dot_dimension_numbers<[1], [0], [0], [1], [0, 0, 1, 1], [], []>} : vector<16x32xf32>, vector<32x128xf32>, vector<16x128xf32> -> vector<16x128xf32>
    %91 = arith.addf %89, %90 : vector<16x128xf32>
    %92 = arith.negf %91 : vector<16x128xf32>
    %93 = math.exp %92 : vector<16x128xf32>
    %cst_25 = arith.constant 1.000000e+00 : f32
    %94 = vector.broadcast %cst_25 : f32 to vector<16x128xf32>
    %95 = arith.addf %94, %93 : vector<16x128xf32>
    %96 = arith.divf %94, %95 : vector<16x128xf32>
    %97 = math.tanh %91 : vector<16x128xf32>
    %98 = vector.extract_strided_slice %96 {offsets = [0, 0], sizes = [16, 32], strides = [1, 1]} : vector<16x128xf32> to vector<16x32xf32>
    %99 = vector.extract_strided_slice %96 {offsets = [0, 32], sizes = [16, 32], strides = [1, 1]} : vector<16x128xf32> to vector<16x32xf32>
    %100 = vector.extract_strided_slice %97 {offsets = [0, 64], sizes = [16, 32], strides = [1, 1]} : vector<16x128xf32> to vector<16x32xf32>
    %101 = vector.extract_strided_slice %96 {offsets = [0, 96], sizes = [16, 32], strides = [1, 1]} : vector<16x128xf32> to vector<16x32xf32>
    %102 = arith.mulf %99, %88 : vector<16x32xf32>
    %103 = arith.mulf %98, %100 : vector<16x32xf32>
    %104 = arith.addf %102, %103 : vector<16x32xf32>
    %105 = math.tanh %104 : vector<16x32xf32>
    %106 = arith.mulf %101, %105 : vector<16x32xf32>
    %c3_i32 = arith.constant 3 : i32
    %107 = vector.broadcast %c3_i32 : i32 to vector<16x1xi32>
    %108 = arith.cmpi sgt, %7, %107 : vector<16x1xi32>
    %109 = vector.shape_cast %108 : vector<16x1xi1> to vector<16x1xi1>
    %110 = vector.broadcast %109 : vector<16x1xi1> to vector<16x32xi1>
    %111 = arith.select %110, %106, %85 : vector<16x32xi1>, vector<16x32xf32>
    %112 = vector.shape_cast %108 : vector<16x1xi1> to vector<16x1xi1>
    %113 = vector.broadcast %112 : vector<16x1xi1> to vector<16x32xi1>
    %114 = arith.select %113, %104, %88 : vector<16x32xi1>, vector<16x32xf32>
    %c64 = arith.constant 64 : index
    %c0_26 = arith.constant 0 : index
    %115 = vector.load %arg11[%c64, %c0_26] : memref<128x128xf32, #tpu.memory_space<vmem>>, vector<16x128xf32>
    %cst_27 = arith.constant dense<0.000000e+00> : vector<16x128xf32>
    %116 = tpu.matmul %111, %8, %cst_27 {dimension_numbers = #tpu.dot_dimension_numbers<[1], [0], [0], [1], [0, 0, 1, 1], [], []>} : vector<16x32xf32>, vector<32x128xf32>, vector<16x128xf32> -> vector<16x128xf32>
    %117 = arith.addf %115, %116 : vector<16x128xf32>
    %118 = arith.negf %117 : vector<16x128xf32>
    %119 = math.exp %118 : vector<16x128xf32>
    %cst_28 = arith.constant 1.000000e+00 : f32
    %120 = vector.broadcast %cst_28 : f32 to vector<16x128xf32>
    %121 = arith.addf %120, %119 : vector<16x128xf32>
    %122 = arith.divf %120, %121 : vector<16x128xf32>
    %123 = math.tanh %117 : vector<16x128xf32>
    %124 = vector.extract_strided_slice %122 {offsets = [0, 0], sizes = [16, 32], strides = [1, 1]} : vector<16x128xf32> to vector<16x32xf32>
    %125 = vector.extract_strided_slice %122 {offsets = [0, 32], sizes = [16, 32], strides = [1, 1]} : vector<16x128xf32> to vector<16x32xf32>
    %126 = vector.extract_strided_slice %123 {offsets = [0, 64], sizes = [16, 32], strides = [1, 1]} : vector<16x128xf32> to vector<16x32xf32>
    %127 = vector.extract_strided_slice %122 {offsets = [0, 96], sizes = [16, 32], strides = [1, 1]} : vector<16x128xf32> to vector<16x32xf32>
    %128 = arith.mulf %125, %114 : vector<16x32xf32>
    %129 = arith.mulf %124, %126 : vector<16x32xf32>
    %130 = arith.addf %128, %129 : vector<16x32xf32>
    %131 = math.tanh %130 : vector<16x32xf32>
    %132 = arith.mulf %127, %131 : vector<16x32xf32>
    %c4_i32 = arith.constant 4 : i32
    %133 = vector.broadcast %c4_i32 : i32 to vector<16x1xi32>
    %134 = arith.cmpi sgt, %7, %133 : vector<16x1xi32>
    %135 = vector.shape_cast %134 : vector<16x1xi1> to vector<16x1xi1>
    %136 = vector.broadcast %135 : vector<16x1xi1> to vector<16x32xi1>
    %137 = arith.select %136, %132, %111 : vector<16x32xi1>, vector<16x32xf32>
    %138 = vector.shape_cast %134 : vector<16x1xi1> to vector<16x1xi1>
    %139 = vector.broadcast %138 : vector<16x1xi1> to vector<16x32xi1>
    %140 = arith.select %139, %130, %114 : vector<16x32xi1>, vector<16x32xf32>
    %c80 = arith.constant 80 : index
    %c0_29 = arith.constant 0 : index
    %141 = vector.load %arg11[%c80, %c0_29] : memref<128x128xf32, #tpu.memory_space<vmem>>, vector<16x128xf32>
    %cst_30 = arith.constant dense<0.000000e+00> : vector<16x128xf32>
    %142 = tpu.matmul %137, %8, %cst_30 {dimension_numbers = #tpu.dot_dimension_numbers<[1], [0], [0], [1], [0, 0, 1, 1], [], []>} : vector<16x32xf32>, vector<32x128xf32>, vector<16x128xf32> -> vector<16x128xf32>
    %143 = arith.addf %141, %142 : vector<16x128xf32>
    %144 = arith.negf %143 : vector<16x128xf32>
    %145 = math.exp %144 : vector<16x128xf32>
    %cst_31 = arith.constant 1.000000e+00 : f32
    %146 = vector.broadcast %cst_31 : f32 to vector<16x128xf32>
    %147 = arith.addf %146, %145 : vector<16x128xf32>
    %148 = arith.divf %146, %147 : vector<16x128xf32>
    %149 = math.tanh %143 : vector<16x128xf32>
    %150 = vector.extract_strided_slice %148 {offsets = [0, 0], sizes = [16, 32], strides = [1, 1]} : vector<16x128xf32> to vector<16x32xf32>
    %151 = vector.extract_strided_slice %148 {offsets = [0, 32], sizes = [16, 32], strides = [1, 1]} : vector<16x128xf32> to vector<16x32xf32>
    %152 = vector.extract_strided_slice %149 {offsets = [0, 64], sizes = [16, 32], strides = [1, 1]} : vector<16x128xf32> to vector<16x32xf32>
    %153 = vector.extract_strided_slice %148 {offsets = [0, 96], sizes = [16, 32], strides = [1, 1]} : vector<16x128xf32> to vector<16x32xf32>
    %154 = arith.mulf %151, %140 : vector<16x32xf32>
    %155 = arith.mulf %150, %152 : vector<16x32xf32>
    %156 = arith.addf %154, %155 : vector<16x32xf32>
    %157 = math.tanh %156 : vector<16x32xf32>
    %158 = arith.mulf %153, %157 : vector<16x32xf32>
    %c5_i32 = arith.constant 5 : i32
    %159 = vector.broadcast %c5_i32 : i32 to vector<16x1xi32>
    %160 = arith.cmpi sgt, %7, %159 : vector<16x1xi32>
    %161 = vector.shape_cast %160 : vector<16x1xi1> to vector<16x1xi1>
    %162 = vector.broadcast %161 : vector<16x1xi1> to vector<16x32xi1>
    %163 = arith.select %162, %158, %137 : vector<16x32xi1>, vector<16x32xf32>
    %164 = vector.shape_cast %160 : vector<16x1xi1> to vector<16x1xi1>
    %165 = vector.broadcast %164 : vector<16x1xi1> to vector<16x32xi1>
    %166 = arith.select %165, %156, %140 : vector<16x32xi1>, vector<16x32xf32>
    %c96 = arith.constant 96 : index
    %c0_32 = arith.constant 0 : index
    %167 = vector.load %arg11[%c96, %c0_32] : memref<128x128xf32, #tpu.memory_space<vmem>>, vector<16x128xf32>
    %cst_33 = arith.constant dense<0.000000e+00> : vector<16x128xf32>
    %168 = tpu.matmul %163, %8, %cst_33 {dimension_numbers = #tpu.dot_dimension_numbers<[1], [0], [0], [1], [0, 0, 1, 1], [], []>} : vector<16x32xf32>, vector<32x128xf32>, vector<16x128xf32> -> vector<16x128xf32>
    %169 = arith.addf %167, %168 : vector<16x128xf32>
    %170 = arith.negf %169 : vector<16x128xf32>
    %171 = math.exp %170 : vector<16x128xf32>
    %cst_34 = arith.constant 1.000000e+00 : f32
    %172 = vector.broadcast %cst_34 : f32 to vector<16x128xf32>
    %173 = arith.addf %172, %171 : vector<16x128xf32>
    %174 = arith.divf %172, %173 : vector<16x128xf32>
    %175 = math.tanh %169 : vector<16x128xf32>
    %176 = vector.extract_strided_slice %174 {offsets = [0, 0], sizes = [16, 32], strides = [1, 1]} : vector<16x128xf32> to vector<16x32xf32>
    %177 = vector.extract_strided_slice %174 {offsets = [0, 32], sizes = [16, 32], strides = [1, 1]} : vector<16x128xf32> to vector<16x32xf32>
    %178 = vector.extract_strided_slice %175 {offsets = [0, 64], sizes = [16, 32], strides = [1, 1]} : vector<16x128xf32> to vector<16x32xf32>
    %179 = vector.extract_strided_slice %174 {offsets = [0, 96], sizes = [16, 32], strides = [1, 1]} : vector<16x128xf32> to vector<16x32xf32>
    %180 = arith.mulf %177, %166 : vector<16x32xf32>
    %181 = arith.mulf %176, %178 : vector<16x32xf32>
    %182 = arith.addf %180, %181 : vector<16x32xf32>
    %183 = math.tanh %182 : vector<16x32xf32>
    %184 = arith.mulf %179, %183 : vector<16x32xf32>
    %c6_i32 = arith.constant 6 : i32
    %185 = vector.broadcast %c6_i32 : i32 to vector<16x1xi32>
    %186 = arith.cmpi sgt, %7, %185 : vector<16x1xi32>
    %187 = vector.shape_cast %186 : vector<16x1xi1> to vector<16x1xi1>
    %188 = vector.broadcast %187 : vector<16x1xi1> to vector<16x32xi1>
    %189 = arith.select %188, %184, %163 : vector<16x32xi1>, vector<16x32xf32>
    %190 = vector.shape_cast %186 : vector<16x1xi1> to vector<16x1xi1>
    %191 = vector.broadcast %190 : vector<16x1xi1> to vector<16x32xi1>
    %192 = arith.select %191, %182, %166 : vector<16x32xi1>, vector<16x32xf32>
    %c112 = arith.constant 112 : index
    %c0_35 = arith.constant 0 : index
    %193 = vector.load %arg11[%c112, %c0_35] : memref<128x128xf32, #tpu.memory_space<vmem>>, vector<16x128xf32>
    %cst_36 = arith.constant dense<0.000000e+00> : vector<16x128xf32>
    %194 = tpu.matmul %189, %8, %cst_36 {dimension_numbers = #tpu.dot_dimension_numbers<[1], [0], [0], [1], [0, 0, 1, 1], [], []>} : vector<16x32xf32>, vector<32x128xf32>, vector<16x128xf32> -> vector<16x128xf32>
    %195 = arith.addf %193, %194 : vector<16x128xf32>
    %196 = arith.negf %195 : vector<16x128xf32>
    %197 = math.exp %196 : vector<16x128xf32>
    %cst_37 = arith.constant 1.000000e+00 : f32
    %198 = vector.broadcast %cst_37 : f32 to vector<16x128xf32>
    %199 = arith.addf %198, %197 : vector<16x128xf32>
    %200 = arith.divf %198, %199 : vector<16x128xf32>
    %201 = math.tanh %195 : vector<16x128xf32>
    %202 = vector.extract_strided_slice %200 {offsets = [0, 0], sizes = [16, 32], strides = [1, 1]} : vector<16x128xf32> to vector<16x32xf32>
    %203 = vector.extract_strided_slice %200 {offsets = [0, 32], sizes = [16, 32], strides = [1, 1]} : vector<16x128xf32> to vector<16x32xf32>
    %204 = vector.extract_strided_slice %201 {offsets = [0, 64], sizes = [16, 32], strides = [1, 1]} : vector<16x128xf32> to vector<16x32xf32>
    %205 = vector.extract_strided_slice %200 {offsets = [0, 96], sizes = [16, 32], strides = [1, 1]} : vector<16x128xf32> to vector<16x32xf32>
    %206 = arith.mulf %203, %192 : vector<16x32xf32>
    %207 = arith.mulf %202, %204 : vector<16x32xf32>
    %208 = arith.addf %206, %207 : vector<16x32xf32>
    %209 = math.tanh %208 : vector<16x32xf32>
    %210 = arith.mulf %205, %209 : vector<16x32xf32>
    %c7_i32 = arith.constant 7 : i32
    %211 = vector.broadcast %c7_i32 : i32 to vector<16x1xi32>
    %212 = arith.cmpi sgt, %7, %211 : vector<16x1xi32>
    %213 = vector.shape_cast %212 : vector<16x1xi1> to vector<16x1xi1>
    %214 = vector.broadcast %213 : vector<16x1xi1> to vector<16x32xi1>
    %215 = arith.select %214, %210, %189 : vector<16x32xi1>, vector<16x32xf32>
    %216 = vector.extract_strided_slice %215 {offsets = [0, 0], sizes = [8, 32], strides = [1, 1]} : vector<16x32xf32> to vector<8x32xf32>
    %217 = vector.extract_strided_slice %215 {offsets = [8, 0], sizes = [8, 32], strides = [1, 1]} : vector<16x32xf32> to vector<8x32xf32>
    %c0_38 = arith.constant 0 : index
    %c0_39 = arith.constant 0 : index
    %218 = vector.load %arg12[%c0_38, %c0_39] : memref<8x128xf32, #tpu.memory_space<vmem>>, vector<8x32xf32>
    tpu.vector_store %arg12[%c0_38, %c0_39], %216 {strides = array<i32>} : memref<8x128xf32, #tpu.memory_space<vmem>>, vector<8x32xf32>,
    %c0_40 = arith.constant 0 : index
    %c32_41 = arith.constant 32 : index
    %219 = vector.load %arg12[%c0_40, %c32_41] : memref<8x128xf32, #tpu.memory_space<vmem>>, vector<8x32xf32>
    tpu.vector_store %arg12[%c0_40, %c32_41], %217 {strides = array<i32>} : memref<8x128xf32, #tpu.memory_space<vmem>>, vector<8x32xf32>,
    %220 = arith.subf %216, %217 : vector<8x32xf32>
    %c0_42 = arith.constant 0 : index
    %c64_43 = arith.constant 64 : index
    %221 = vector.load %arg12[%c0_42, %c64_43] : memref<8x128xf32, #tpu.memory_space<vmem>>, vector<8x32xf32>
    tpu.vector_store %arg12[%c0_42, %c64_43], %220 {strides = array<i32>} : memref<8x128xf32, #tpu.memory_space<vmem>>, vector<8x32xf32>,
    %222 = arith.mulf %216, %217 : vector<8x32xf32>
    %c0_44 = arith.constant 0 : index
    %c96_45 = arith.constant 96 : index
    %223 = vector.load %arg12[%c0_44, %c96_45] : memref<8x128xf32, #tpu.memory_space<vmem>>, vector<8x32xf32>
    tpu.vector_store %arg12[%c0_44, %c96_45], %222 {strides = array<i32>} : memref<8x128xf32, #tpu.memory_space<vmem>>, vector<8x32xf32>,
    %c0_46 = arith.constant 0 : index
    %c0_47 = arith.constant 0 : index
    %224 = vector.load %arg12[%c0_46, %c0_47] : memref<8x128xf32, #tpu.memory_space<vmem>>, vector<8x128xf32>
    %c0_48 = arith.constant 0 : index
    %c0_49 = arith.constant 0 : index
    %225 = vector.load %arg6[%c0_48, %c0_49] : memref<128x32xf32, #tpu.memory_space<vmem>>, vector<128x32xf32>
    %cst_50 = arith.constant dense<0.000000e+00> : vector<8x32xf32>
    %226 = tpu.matmul %224, %225, %cst_50 {dimension_numbers = #tpu.dot_dimension_numbers<[1], [0], [0], [1], [0, 0, 1, 1], [], []>} : vector<8x128xf32>, vector<128x32xf32>, vector<8x32xf32> -> vector<8x32xf32>
    %c0_51 = arith.constant 0 : index
    %c0_52 = arith.constant 0 : index
    %227 = vector.load %arg7[%c0_51, %c0_52] : memref<1x32xf32, #tpu.memory_space<vmem>>, vector<1x32xf32>
    %228 = vector.broadcast %227 : vector<1x32xf32> to vector<8x32xf32>
    %229 = arith.addf %226, %228 : vector<8x32xf32>
    %230 = math.tanh %229 : vector<8x32xf32>
    %c0_53 = arith.constant 0 : index
    %c0_54 = arith.constant 0 : index
    %231 = vector.load %arg8[%c0_53, %c0_54] : memref<32x3xf32, #tpu.memory_space<vmem>>, vector<32x3xf32>
    %cst_55 = arith.constant dense<0.000000e+00> : vector<8x3xf32>
    %232 = tpu.matmul %230, %231, %cst_55 {dimension_numbers = #tpu.dot_dimension_numbers<[1], [0], [0], [1], [0, 0, 1, 1], [], []>} : vector<8x32xf32>, vector<32x3xf32>, vector<8x3xf32> -> vector<8x3xf32>
    %c0_56 = arith.constant 0 : index
    %c0_57 = arith.constant 0 : index
    %233 = vector.load %arg9[%c0_56, %c0_57] : memref<1x3xf32, #tpu.memory_space<vmem>>, vector<1x3xf32>
    %234 = vector.broadcast %233 : vector<1x3xf32> to vector<8x3xf32>
    %235 = arith.addf %232, %234 : vector<8x3xf32>
    %c0_58 = arith.constant 0 : index
    %c0_59 = arith.constant 0 : index
    %236 = vector.load %arg10[%c0_58, %c0_59] : memref<8x3xf32, #tpu.memory_space<vmem>>, vector<8x3xf32>
    tpu.vector_store %arg10[%c0_58, %c0_59], %235 {strides = array<i32>} : memref<8x3xf32, #tpu.memory_space<vmem>>, vector<8x3xf32>,
    return
  }
  func.func @transform_0(%arg0: i32) -> (i32, i32) {
    %c0_i32 = arith.constant 0 : i32
    %c0_i32_0 = arith.constant 0 : i32
    %c0_i32_1 = arith.constant 0 : i32
    return %c0_i32, %c0_i32_0 : i32, i32
  }
  func.func @transform_1(%arg0: i32) -> (i32, i32) {
    %c0_i32 = arith.constant 0 : i32
    %c0_i32_0 = arith.constant 0 : i32
    %c0_i32_1 = arith.constant 0 : i32
    return %c0_i32, %c0_i32_0 : i32, i32
  }
  func.func @transform_2(%arg0: i32) -> (i32, i32) {
    %c0_i32 = arith.constant 0 : i32
    %c0_i32_0 = arith.constant 0 : i32
    %c0_i32_1 = arith.constant 0 : i32
    return %c0_i32, %c0_i32_0 : i32, i32
  }
  func.func @transform_3(%arg0: i32) -> (i32, i32) {
    %c0_i32 = arith.constant 0 : i32
    %c0_i32_0 = arith.constant 0 : i32
    %c0_i32_1 = arith.constant 0 : i32
    return %c0_i32, %c0_i32_0 : i32, i32
  }
  func.func @transform_4(%arg0: i32) -> (i32, i32) {
    %c0_i32 = arith.constant 0 : i32
    %c0_i32_0 = arith.constant 0 : i32
    %c0_i32_1 = arith.constant 0 : i32
    return %c0_i32, %c0_i32_0 : i32, i32
  }
  func.func @transform_5(%arg0: i32) -> (i32, i32) {
    %c0_i32 = arith.constant 0 : i32
    %c0_i32_0 = arith.constant 0 : i32
    %c0_i32_1 = arith.constant 0 : i32
    return %c0_i32, %c0_i32_0 : i32, i32
  }
  func.func @transform_6(%arg0: i32) -> (i32, i32) {
    %c0_i32 = arith.constant 0 : i32
    %c0_i32_0 = arith.constant 0 : i32
    %c0_i32_1 = arith.constant 0 : i32
    return %c0_i32, %c0_i32_0 : i32, i32
  }
  func.func @transform_7(%arg0: i32) -> (i32, i32) {
    %c0_i32 = arith.constant 0 : i32
    %c0_i32_0 = arith.constant 0 : i32
    %c0_i32_1 = arith.constant 0 : i32
    return %c0_i32, %c0_i32_0 : i32, i32
  }
  func.func @transform_8(%arg0: i32) -> (i32, i32) {
    %c0_i32 = arith.constant 0 : i32
    %c0_i32_0 = arith.constant 0 : i32
    %c0_i32_1 = arith.constant 0 : i32
    return %c0_i32, %c0_i32_0 : i32, i32
  }
  func.func @transform_9(%arg0: i32) -> (i32, i32) {
    %c0_i32 = arith.constant 0 : i32
    %c0_i32_0 = arith.constant 0 : i32
    %c0_i32_1 = arith.constant 0 : i32
    return %c0_i32, %c0_i32_0 : i32, i32
  }
}

</mosaic_0001>

<llo_original>
// kernel: tpu_custom_call.1
$region0: #{tpu_custom_call.1}
  #allocation0 [shape = 'u32[]', space=smem, size = 0x4, offset = 0x4, fixed_abs, tag = 'smem constant byte address 0x4 - core index']
  #allocation1 [shape = 'u32[144,128]{1,0:T(1,128)}', space=vmem, size = 0x12000, scoped, tag = 'internal scratch']
  #allocation2 [shape = 'f32[128,128]{1,0:T(8,128)}', space=vmem, size = 0x10000, scoped, tag = 'scratch operand']
  #allocation3 [shape = 'f32[8,128]{1,0:T(8,128)}', space=vmem, size = 0x1000, scoped, tag = 'scratch operand']
  %s0 = inlined_call_operand.vmem [shape: f32[128,32], index: 0, kind: input, shape index: {}]
  %s1 = inlined_call_operand.vmem [shape: s32[16,1], index: 1, kind: input, shape index: {}]
  %s2 = inlined_call_operand.vmem [shape: f32[32,128], index: 2, kind: input, shape index: {}]
  %s3 = inlined_call_operand.vmem [shape: f32[32,128], index: 3, kind: input, shape index: {}]
  %s4 = inlined_call_operand.vmem [shape: f32[1,128], index: 4, kind: input, shape index: {}]
  %s5 = inlined_call_operand.vmem [shape: f32[128,32], index: 5, kind: input, shape index: {}]
  %s6 = inlined_call_operand.vmem [shape: f32[1,32], index: 6, kind: input, shape index: {}]
  %s7 = inlined_call_operand.vmem [shape: f32[32,3], index: 7, kind: input, shape index: {}]
  %s8 = inlined_call_operand.vmem [shape: f32[1,3], index: 8, kind: input, shape index: {}]
  %s9 = inlined_call_operand.vmem [shape: f32[8,3], index: 9, kind: output, shape index: {}]
  %s10 = sld [smem:[#allocation0]]
  $region46: #{tpu_custom_call.1} parent=0
    _
  %s12 = ssub.s32 1, %s10
  %s13 = scalar_select 0, %s12, %s10
  // Predicated region
  $region2: #{tpu_custom_call.1} parent=0 // pred_check
    _
  $region3: #{tpu_custom_call.1} parent=0 // pred_check_branch
    %15 = sbr.rel (0) target = $region5
  $region4: #{tpu_custom_call.1} parent=0 // pred_region
    _
  $region5: #{tpu_custom_call.1} parent=0 // pred_fallthru
    _
  // Predicated region
  $region6: #{tpu_custom_call.1} parent=0 // pred_check
    _
  $region7: #{tpu_custom_call.1} parent=0 // pred_check_branch
    %17 = sbr.rel (0) target = $region9
  $region8: #{tpu_custom_call.1} parent=0 // pred_region
    _
  $region9: #{tpu_custom_call.1} parent=0 // pred_fallthru
    _
  // Predicated region
  $region10: #{tpu_custom_call.1} parent=0 // pred_check
    _
  $region11: #{tpu_custom_call.1} parent=0 // pred_check_branch
    %19 = sbr.rel (0) target = $region13
  $region12: #{tpu_custom_call.1} parent=0 // pred_region
    _
  $region13: #{tpu_custom_call.1} parent=0 // pred_fallthru
    _
  // Predicated region
  $region14: #{tpu_custom_call.1} parent=0 // pred_check
    _
  $region15: #{tpu_custom_call.1} parent=0 // pred_check_branch
    %21 = sbr.rel (0) target = $region17
  $region16: #{tpu_custom_call.1} parent=0 // pred_region
    _
  $region17: #{tpu_custom_call.1} parent=0 // pred_fallthru
    _
  // Predicated region
  $region18: #{tpu_custom_call.1} parent=0 // pred_check
    _
  $region19: #{tpu_custom_call.1} parent=0 // pred_check_branch
    %23 = sbr.rel (0) target = $region21
  $region20: #{tpu_custom_call.1} parent=0 // pred_region
    _
  $region21: #{tpu_custom_call.1} parent=0 // pred_fallthru
    _
  // Predicated region
  $region22: #{tpu_custom_call.1} parent=0 // pred_check
    _
  $region23: #{tpu_custom_call.1} parent=0 // pred_check_branch
    %25 = sbr.rel (0) target = $region25
  $region24: #{tpu_custom_call.1} parent=0 // pred_region
    _
  $region25: #{tpu_custom_call.1} parent=0 // pred_fallthru
    _
  // Predicated region
  $region26: #{tpu_custom_call.1} parent=0 // pred_check
    _
  $region27: #{tpu_custom_call.1} parent=0 // pred_check_branch
    %27 = sbr.rel (0) target = $region29
  $region28: #{tpu_custom_call.1} parent=0 // pred_region
    _
  $region29: #{tpu_custom_call.1} parent=0 // pred_fallthru
    _
  // Predicated region
  $region30: #{tpu_custom_call.1} parent=0 // pred_check
    _
  $region31: #{tpu_custom_call.1} parent=0 // pred_check_branch
    %29 = sbr.rel (0) target = $region33
  $region32: #{tpu_custom_call.1} parent=0 // pred_region
    _
  $region33: #{tpu_custom_call.1} parent=0 // pred_fallthru
    _
  // Predicated region
  $region34: #{tpu_custom_call.1} parent=0 // pred_check
    _
  $region35: #{tpu_custom_call.1} parent=0 // pred_check_branch
    %31 = sbr.rel (0) target = $region37
  $region36: #{tpu_custom_call.1} parent=0 // pred_region
    _
  $region37: #{tpu_custom_call.1} parent=0 // pred_fallthru
    _
  %v32 = vld [vmem:[%s0] sm:$0xff]
  %v33 = vld [vmem:[%s0 + $0x8] sm:$0xff]
  %v34 = vld [vmem:[%s0 + $0x10] sm:$0xff]
  %v35 = vld [vmem:[%s0 + $0x18] sm:$0xff]
  %v36 = vld [vmem:[%s0 + $0x20] sm:$0xff]
  %v37 = vld [vmem:[%s0 + $0x28] sm:$0xff]
  %v38 = vld [vmem:[%s0 + $0x30] sm:$0xff]
  %v39 = vld [vmem:[%s0 + $0x38] sm:$0xff]
  %v40 = vld [vmem:[%s0 + $0x40] sm:$0xff]
  %v41 = vld [vmem:[%s0 + $0x48] sm:$0xff]
  %v42 = vld [vmem:[%s0 + $0x50] sm:$0xff]
  %v43 = vld [vmem:[%s0 + $0x58] sm:$0xff]
  %v44 = vld [vmem:[%s0 + $0x60] sm:$0xff]
  %v45 = vld [vmem:[%s0 + $0x68] sm:$0xff]
  %v46 = vld [vmem:[%s0 + $0x70] sm:$0xff]
  %v47 = vld [vmem:[%s0 + $0x78] sm:$0xff]
  %v48 = vld [vmem:[%s2] sm:$0xff]
  %v49 = vld [vmem:[%s2 + $0x8] sm:$0xff]
  %v50 = vld [vmem:[%s2 + $0x10] sm:$0xff]
  %v51 = vld [vmem:[%s2 + $0x18] sm:$0xff]
  %v52 = vld [vmem:[%s4] sm:$0x1]
  %v54 = vlaneseq
  %v55 = vshrl.u32 %v54, 7
  %v56 = vsub.s32 0, %v55
  %v57 = vrot.slane %v52, %v56
  %vm59 = vcmask 261120
  %v61 = vsel %vm59, %v32, 0
  %v64 = vsel %vm59, %v33, 0
  %v67 = vsel %vm59, %v34, 0
  %v70 = vsel %vm59, %v35, 0
  %v73 = vsel %vm59, %v36, 0
  %v76 = vsel %vm59, %v37, 0
  %v79 = vsel %vm59, %v38, 0
  %v82 = vsel %vm59, %v39, 0
  %v85 = vsel %vm59, %v40, 0
  %v88 = vsel %vm59, %v41, 0
  %v91 = vsel %vm59, %v42, 0
  %v94 = vsel %vm59, %v43, 0
  %v97 = vsel %vm59, %v44, 0
  %v100 = vsel %vm59, %v45, 0
  %v103 = vsel %vm59, %v46, 0
  %v106 = vsel %vm59, %v47, 0
  %108 = vmatprep.subr.mxu0 0.0
  %109 = vmatpush1.msra.mxu0 %v48
  %110 = vmatprep.subr.mxu0 0.0
  %111 = vmatpush1.msra.mxu0 %v49
  %112 = vmatprep.subr.mxu0 0.0
  %113 = vmatpush1.msra.mxu0 %v50
  %114 = vmatprep.subr.mxu0 0.0
  %115 = vmatpush1.msra.mxu0 %v51
  %116 = vmatprep.subr.mxu0 0.0
  %117 = vmatpush1.msra.mxu0 0.0
  %118 = vmatprep.subr.mxu0 0.0
  %119 = vmatpush1.msra.mxu0 0.0
  %120 = vmatprep.subr.mxu0 0.0
  %121 = vmatpush1.msra.mxu0 0.0
  %122 = vmatprep.subr.mxu0 0.0
  %123 = vmatpush1.msra.mxu0 0.0
  %124 = vmatprep.subr.mxu0 0.0
  %125 = vmatpush1.msra.mxu0 0.0
  %126 = vmatprep.subr.mxu0 0.0
  %127 = vmatpush1.msra.mxu0 0.0
  %128 = vmatprep.subr.mxu0 0.0
  %129 = vmatpush1.msra.mxu0 0.0
  %130 = vmatprep.subr.mxu0 0.0
  %131 = vmatpush1.msra.mxu0 0.0
  %132 = vmatprep.subr.mxu0 0.0
  %133 = vmatpush1.msra.mxu0 0.0
  %134 = vmatprep.subr.mxu0 0.0
  %135 = vmatpush1.msra.mxu0 0.0
  %136 = vmatprep.subr.mxu0 0.0
  %137 = vmatpush1.msra.mxu0 0.0
  %138 = vmatprep.subr.mxu0 0.0
  %139 = vmatpush1.msra.mxu0 0.0
  %140 = vmatprep.subr.mxu0 0.0
  %141 = vmatpush1.msra.mxu0 0.0
  %142 = vmatprep.subr.mxu0 0.0
  %143 = vmatpush1.msra.mxu0 0.0
  %144 = vmatprep.subr.mxu0 0.0
  %145 = vmatpush1.msra.mxu0 0.0
  %146 = vmatprep.subr.mxu0 0.0
  %147 = vmatpush1.msra.mxu0 0.0
  %148 = vmatprep.subr.mxu0 0.0
  %149 = vmatpush1.msra.mxu0 0.0
  %150 = vmatprep.subr.mxu0 0.0
  %151 = vmatpush1.msra.mxu0 0.0
  %152 = vmatprep.subr.mxu0 0.0
  %153 = vmatpush1.msra.mxu0 0.0
  %154 = vmatprep.subr.mxu0 0.0
  %155 = vmatpush1.msra.mxu0 0.0
  %156 = vmatprep.subr.mxu0 0.0
  %157 = vmatpush1.msra.mxu0 0.0
  %158 = vmatprep.subr.mxu0 0.0
  %159 = vmatpush1.msra.mxu0 0.0
  %160 = vmatprep.subr.mxu0 0.0
  %161 = vmatpush1.msra.mxu0 0.0
  %162 = vmatprep.subr.mxu0 0.0
  %163 = vmatpush1.msra.mxu0 0.0
  %164 = vmatprep.subr.mxu0 0.0
  %165 = vmatpush1.msra.mxu0 0.0
  %166 = vmatprep.subr.mxu0 0.0
  %167 = vmatpush1.msra.mxu0 0.0
  %168 = vmatprep.subr.mxu0 0.0
  %169 = vmatpush1.msra.mxu0 0.0
  %170 = vmatprep.subr.mxu0 0.0
  %171 = vmatpush1.msra.mxu0 0.0
  %172 = vmatprep.mubr.f32.mxu0 0.0
  %173 = vmatmul.mubr.f32.gmra.mrb[0].mxu0 %v61
  %v174 = vpop.f32.mrb[0].mxu0
  %v175 = vadd.f32 %v57, %v174
  %v176 = vpop.f32.mrb[0].mxu0
  %177 = vmatprep.mubr.f32.mxu0 0.0
  %178 = vmatmul.mubr.f32.gmra.mrb[0].mxu0 %v64
  %v179 = vpop.f32.mrb[0].mxu0
  %v180 = vadd.f32 %v57, %v179
  %v181 = vpop.f32.mrb[0].mxu0
  %182 = vmatprep.mubr.f32.mxu0 0.0
  %183 = vmatmul.mubr.f32.gmra.mrb[0].mxu0 %v67
  %v184 = vpop.f32.mrb[0].mxu0
  %v185 = vadd.f32 %v57, %v184
  %v186 = vpop.f32.mrb[0].mxu0
  %187 = vmatprep.mubr.f32.mxu0 0.0
  %188 = vmatmul.mubr.f32.gmra.mrb[0].mxu0 %v70
  %v189 = vpop.f32.mrb[0].mxu0
  %v190 = vadd.f32 %v57, %v189
  %v191 = vpop.f32.mrb[0].mxu0
  %192 = vmatprep.mubr.f32.mxu0 0.0
  %193 = vmatmul.mubr.f32.gmra.mrb[0].mxu0 %v73
  %v194 = vpop.f32.mrb[0].mxu0
  %v195 = vadd.f32 %v57, %v194
  %v196 = vpop.f32.mrb[0].mxu0
  %197 = vmatprep.mubr.f32.mxu0 0.0
  %198 = vmatmul.mubr.f32.gmra.mrb[0].mxu0 %v76
  %v199 = vpop.f32.mrb[0].mxu0
  %v200 = vadd.f32 %v57, %v199
  %v201 = vpop.f32.mrb[0].mxu0
  %202 = vmatprep.mubr.f32.mxu0 0.0
  %203 = vmatmul.mubr.f32.gmra.mrb[0].mxu0 %v79
  %v204 = vpop.f32.mrb[0].mxu0
  %v205 = vadd.f32 %v57, %v204
  %v206 = vpop.f32.mrb[0].mxu0
  %207 = vmatprep.mubr.f32.mxu0 0.0
  %208 = vmatmul.mubr.f32.gmra.mrb[0].mxu0 %v82
  %v209 = vpop.f32.mrb[0].mxu0
  %v210 = vadd.f32 %v57, %v209
  %v211 = vpop.f32.mrb[0].mxu0
  %212 = vmatprep.mubr.f32.mxu0 0.0
  %213 = vmatmul.mubr.f32.gmra.mrb[0].mxu0 %v85
  %v214 = vpop.f32.mrb[0].mxu0
  %v215 = vadd.f32 %v57, %v214
  %v216 = vpop.f32.mrb[0].mxu0
  %217 = vmatprep.mubr.f32.mxu0 0.0
  %218 = vmatmul.mubr.f32.gmra.mrb[0].mxu0 %v88
  %v219 = vpop.f32.mrb[0].mxu0
  %v220 = vadd.f32 %v57, %v219
  %v221 = vpop.f32.mrb[0].mxu0
  %222 = vmatprep.mubr.f32.mxu0 0.0
  %223 = vmatmul.mubr.f32.gmra.mrb[0].mxu0 %v91
  %v224 = vpop.f32.mrb[0].mxu0
  %v225 = vadd.f32 %v57, %v224
  %v226 = vpop.f32.mrb[0].mxu0
  %227 = vmatprep.mubr.f32.mxu0 0.0
  %228 = vmatmul.mubr.f32.gmra.mrb[0].mxu0 %v94
  %v229 = vpop.f32.mrb[0].mxu0
  %v230 = vadd.f32 %v57, %v229
  %v231 = vpop.f32.mrb[0].mxu0
  %232 = vmatprep.mubr.f32.mxu0 0.0
  %233 = vmatmul.mubr.f32.gmra.mrb[0].mxu0 %v97
  %v234 = vpop.f32.mrb[0].mxu0
  %v235 = vadd.f32 %v57, %v234
  %v236 = vpop.f32.mrb[0].mxu0
  %237 = vmatprep.mubr.f32.mxu0 0.0
  %238 = vmatmul.mubr.f32.gmra.mrb[0].mxu0 %v100
  %v239 = vpop.f32.mrb[0].mxu0
  %v240 = vadd.f32 %v57, %v239
  %v241 = vpop.f32.mrb[0].mxu0
  %242 = vmatprep.mubr.f32.mxu0 0.0
  %243 = vmatmul.mubr.f32.gmra.mrb[0].mxu0 %v103
  %v244 = vpop.f32.mrb[0].mxu0
  %v245 = vadd.f32 %v57, %v244
  %v246 = vpop.f32.mrb[0].mxu0
  %247 = vmatprep.mubr.f32.mxu0 0.0
  %248 = vmatmul.mubr.f32.gmra.mrb[0].mxu0 %v106
  %v249 = vpop.f32.mrb[0].mxu0
  %v250 = vadd.f32 %v57, %v249
  %v251 = vpop.f32.mrb[0].mxu0
  %252 = vdwg.mxu0
  %253 = vst [vmem:[#allocation2] sm:$0xff] %v175
  %254 = vst [vmem:[#allocation2 + $0x8] sm:$0xff] %v180
  %255 = vst [vmem:[#allocation2 + $0x10] sm:$0xff] %v185
  %256 = vst [vmem:[#allocation2 + $0x18] sm:$0xff] %v190
  %257 = vst [vmem:[#allocation2 + $0x20] sm:$0xff] %v195
  %258 = vst [vmem:[#allocation2 + $0x28] sm:$0xff] %v200
  %259 = vst [vmem:[#allocation2 + $0x30] sm:$0xff] %v205
  %260 = vst [vmem:[#allocation2 + $0x38] sm:$0xff] %v210
  %261 = vst [vmem:[#allocation2 + $0x40] sm:$0xff] %v215
  %262 = vst [vmem:[#allocation2 + $0x48] sm:$0xff] %v220
  %263 = vst [vmem:[#allocation2 + $0x50] sm:$0xff] %v225
  %264 = vst [vmem:[#allocation2 + $0x58] sm:$0xff] %v230
  %265 = vst [vmem:[#allocation2 + $0x60] sm:$0xff] %v235
  %266 = vst [vmem:[#allocation2 + $0x68] sm:$0xff] %v240
  %267 = vst [vmem:[#allocation2 + $0x70] sm:$0xff] %v245
  %268 = vst [vmem:[#allocation2 + $0x78] sm:$0xff] %v250
  %v269 = vld [vmem:[%s1] sm:$0xff]
  %v270 = vld [vmem:[%s1 + $0x8] sm:$0xff]
  %v271 = vld [vmem:[%s3] sm:$0xff]
  %v272 = vld [vmem:[%s3 + $0x8] sm:$0xff]
  %v273 = vld [vmem:[%s3 + $0x10] sm:$0xff]
  %v274 = vld [vmem:[%s3 + $0x18] sm:$0xff]
  %v275 = vld [vmem:[#allocation2] sm:$0xff]
  %v276 = vld [vmem:[#allocation2 + $0x8] sm:$0xff]
  %v278 = vsel %vm59, 0.0, 0
  %280 = vmatprep.subr.mxu0 0.0
  %281 = vmatpush1.msra.mxu0 %v271
  %282 = vmatprep.subr.mxu0 0.0
  %283 = vmatpush1.msra.mxu0 %v272
  %284 = vmatprep.subr.mxu0 0.0
  %285 = vmatpush1.msra.mxu0 %v273
  %286 = vmatprep.subr.mxu0 0.0
  %287 = vmatpush1.msra.mxu0 %v274
  %288 = vmatprep.subr.mxu0 0.0
  %289 = vmatpush1.msra.mxu0 0.0
  %290 = vmatprep.subr.mxu0 0.0
  %291 = vmatpush1.msra.mxu0 0.0
  %292 = vmatprep.subr.mxu0 0.0
  %293 = vmatpush1.msra.mxu0 0.0
  %294 = vmatprep.subr.mxu0 0.0
  %295 = vmatpush1.msra.mxu0 0.0
  %296 = vmatprep.subr.mxu0 0.0
  %297 = vmatpush1.msra.mxu0 0.0
  %298 = vmatprep.subr.mxu0 0.0
  %299 = vmatpush1.msra.mxu0 0.0
  %300 = vmatprep.subr.mxu0 0.0
  %301 = vmatpush1.msra.mxu0 0.0
  %302 = vmatprep.subr.mxu0 0.0
  %303 = vmatpush1.msra.mxu0 0.0
  %304 = vmatprep.subr.mxu0 0.0
  %305 = vmatpush1.msra.mxu0 0.0
  %306 = vmatprep.subr.mxu0 0.0
  %307 = vmatpush1.msra.mxu0 0.0
  %308 = vmatprep.subr.mxu0 0.0
  %309 = vmatpush1.msra.mxu0 0.0
  %310 = vmatprep.subr.mxu0 0.0
  %311 = vmatpush1.msra.mxu0 0.0
  %312 = vmatprep.subr.mxu0 0.0
  %313 = vmatpush1.msra.mxu0 0.0
  %314 = vmatprep.subr.mxu0 0.0
  %315 = vmatpush1.msra.mxu0 0.0
  %316 = vmatprep.subr.mxu0 0.0
  %317 = vmatpush1.msra.mxu0 0.0
  %318 = vmatprep.subr.mxu0 0.0
  %319 = vmatpush1.msra.mxu0 0.0
  %320 = vmatprep.subr.mxu0 0.0
  %321 = vmatpush1.msra.mxu0 0.0
  %322 = vmatprep.subr.mxu0 0.0
  %323 = vmatpush1.msra.mxu0 0.0
  %324 = vmatprep.subr.mxu0 0.0
  %325 = vmatpush1.msra.mxu0 0.0
  %326 = vmatprep.subr.mxu0 0.0
  %327 = vmatpush1.msra.mxu0 0.0
  %328 = vmatprep.subr.mxu0 0.0
  %329 = vmatpush1.msra.mxu0 0.0
  %330 = vmatprep.subr.mxu0 0.0
  %331 = vmatpush1.msra.mxu0 0.0
  %332 = vmatprep.subr.mxu0 0.0
  %333 = vmatpush1.msra.mxu0 0.0
  %334 = vmatprep.subr.mxu0 0.0
  %335 = vmatpush1.msra.mxu0 0.0
  %336 = vmatprep.subr.mxu0 0.0
  %337 = vmatpush1.msra.mxu0 0.0
  %338 = vmatprep.subr.mxu0 0.0
  %339 = vmatpush1.msra.mxu0 0.0
  %340 = vmatprep.subr.mxu0 0.0
  %341 = vmatpush1.msra.mxu0 0.0
  %342 = vmatprep.subr.mxu0 0.0
  %343 = vmatpush1.msra.mxu0 0.0
  %344 = vmatprep.mubr.f32.mxu0 0.0
  %345 = vmatmul.mubr.f32.gmra.mrb[0].mxu0 %v278
  %v346 = vpop.f32.mrb[0].mxu0
  %v347 = vadd.f32 0.0, %v346
  %v348 = vpop.f32.mrb[0].mxu0
  %349 = vmatprep.mubr.f32.mxu0 0.0
  %350 = vmatmul.mubr.f32.gmra.mrb[0].mxu0 %v278
  %v351 = vpop.f32.mrb[0].mxu0
  %v352 = vadd.f32 0.0, %v351
  %v353 = vpop.f32.mrb[0].mxu0
  %354 = vdwg.mxu0
  %v355 = vadd.f32 %v275, %v347
  %v356 = vadd.f32 %v276, %v352
  %v357 = vxor.u32 %v355, 2147483648
  %v358 = vxor.u32 %v356, 2147483648
  %v359 = vmul.f32 %v357, 1.442695
  %v360 = vpow.pop %v359
  %v361 = vmul.f32 %v358, 1.442695
  %v362 = vpow.pop %v361
  %v363 = vadd.f32 %v360, 1.0
  %v364 = vadd.f32 %v362, 1.0
  %v365 = vrcp.pop %v363
  %v366 = vmul.f32 1.0, %v365
  %v367 = vrcp.pop %v364
  %v368 = vmul.f32 1.0, %v367
  %v369 = vtanh.pop %v355
  %v370 = vtanh.pop %v356
  %v371 = vmul.f32 %v366, 0.0
  %v372 = vmul.f32 %v368, 0.0
  %375 = vrot.lane.b32.xlu0 %v369, 64
  %v376 = vpop.permute.xlu0 %375
  %377 = vrot.lane.b32.xlu0 %v370, 64
  %v378 = vpop.permute.xlu0 %377
  %v381 = vmul.f32 %v366, %v376
  %v382 = vmul.f32 %v368, %v378
  %385 = vrot.lane.b32.xlu0 %v381, 32
  %v386 = vpop.permute.xlu0 %385
  %387 = vrot.lane.b32.xlu0 %v382, 32
  %v388 = vpop.permute.xlu0 %387
  %v391 = vadd.f32 %v371, %v386
  %v392 = vadd.f32 %v372, %v388
  %v393 = vtanh.pop %v391
  %v394 = vtanh.pop %v392
  %397 = vrot.lane.b32.xlu0 %v393, 64
  %v398 = vpop.permute.xlu0 %397
  %399 = vrot.lane.b32.xlu0 %v394, 64
  %v400 = vpop.permute.xlu0 %399
  %v403 = vmul.f32 %v366, %v398
  %v404 = vmul.f32 %v368, %v400
  %vm405 = vcmp.gt.s32.totalorder %v269, 0
  %vm406 = vcmp.gt.s32.totalorder %v270, 0
  %v407 = vsel %vm405, 1, 0
  %v408 = vsel %vm406, 1, 0
  %409 = vset.pattern.permute.xlu0 0
  %410 = vperm.xlu0 %409, %v407
  %v411 = vpop.permute.xlu0 %410
  %412 = vset.pattern.permute.xlu0 0
  %413 = vperm.xlu0 %412, %v408
  %v414 = vpop.permute.xlu0 %413
  %vm415 = vcmp.eq.s32.totalorder %v411, 1
  %vm416 = vcmp.eq.s32.totalorder %v414, 1
  %v417 = vsel %vm415, %v403, 0.0
  %v418 = vsel %vm416, %v404, 0.0
  %v419 = vsel %vm415, %v391, 0.0
  %v420 = vsel %vm416, %v392, 0.0
  %v421 = vld [vmem:[#allocation2 + $0x10] sm:$0xff]
  %v422 = vld [vmem:[#allocation2 + $0x18] sm:$0xff]
  %425 = vrot.lane.b32.xlu0 %v417, 32
  %v426 = vpop.permute.xlu0 %425
  %427 = vrot.lane.b32.xlu0 %v418, 32
  %v428 = vpop.permute.xlu0 %427
  %v429 = vsel %vm59, %v426, 0
  %v431 = vsel %vm59, %v428, 0
  %433 = vmatprep.subr.mxu0 0.0
  %434 = vmatpush1.msra.mxu0 %v271
  %435 = vmatprep.subr.mxu0 0.0
  %436 = vmatpush1.msra.mxu0 %v272
  %437 = vmatprep.subr.mxu0 0.0
  %438 = vmatpush1.msra.mxu0 %v273
  %439 = vmatprep.subr.mxu0 0.0
  %440 = vmatpush1.msra.mxu0 %v274
  %441 = vmatprep.subr.mxu0 0.0
  %442 = vmatpush1.msra.mxu0 0.0
  %443 = vmatprep.subr.mxu0 0.0
  %444 = vmatpush1.msra.mxu0 0.0
  %445 = vmatprep.subr.mxu0 0.0
  %446 = vmatpush1.msra.mxu0 0.0
  %447 = vmatprep.subr.mxu0 0.0
  %448 = vmatpush1.msra.mxu0 0.0
  %449 = vmatprep.subr.mxu0 0.0
  %450 = vmatpush1.msra.mxu0 0.0
  %451 = vmatprep.subr.mxu0 0.0
  %452 = vmatpush1.msra.mxu0 0.0
  %453 = vmatprep.subr.mxu0 0.0
  %454 = vmatpush1.msra.mxu0 0.0
  %455 = vmatprep.subr.mxu0 0.0
  %456 = vmatpush1.msra.mxu0 0.0
  %457 = vmatprep.subr.mxu0 0.0
  %458 = vmatpush1.msra.mxu0 0.0
  %459 = vmatprep.subr.mxu0 0.0
  %460 = vmatpush1.msra.mxu0 0.0
  %461 = vmatprep.subr.mxu0 0.0
  %462 = vmatpush1.msra.mxu0 0.0
  %463 = vmatprep.subr.mxu0 0.0
  %464 = vmatpush1.msra.mxu0 0.0
  %465 = vmatprep.subr.mxu0 0.0
  %466 = vmatpush1.msra.mxu0 0.0
  %467 = vmatprep.subr.mxu0 0.0
  %468 = vmatpush1.msra.mxu0 0.0
  %469 = vmatprep.subr.mxu0 0.0
  %470 = vmatpush1.msra.mxu0 0.0
  %471 = vmatprep.subr.mxu0 0.0
  %472 = vmatpush1.msra.mxu0 0.0
  %473 = vmatprep.subr.mxu0 0.0
  %474 = vmatpush1.msra.mxu0 0.0
  %475 = vmatprep.subr.mxu0 0.0
  %476 = vmatpush1.msra.mxu0 0.0
  %477 = vmatprep.subr.mxu0 0.0
  %478 = vmatpush1.msra.mxu0 0.0
  %479 = vmatprep.subr.mxu0 0.0
  %480 = vmatpush1.msra.mxu0 0.0
  %481 = vmatprep.subr.mxu0 0.0
  %482 = vmatpush1.msra.mxu0 0.0
  %483 = vmatprep.subr.mxu0 0.0
  %484 = vmatpush1.msra.mxu0 0.0
  %485 = vmatprep.subr.mxu0 0.0
  %486 = vmatpush1.msra.mxu0 0.0
  %487 = vmatprep.subr.mxu0 0.0
  %488 = vmatpush1.msra.mxu0 0.0
  %489 = vmatprep.subr.mxu0 0.0
  %490 = vmatpush1.msra.mxu0 0.0
  %491 = vmatprep.subr.mxu0 0.0
  %492 = vmatpush1.msra.mxu0 0.0
  %493 = vmatprep.subr.mxu0 0.0
  %494 = vmatpush1.msra.mxu0 0.0
  %495 = vmatprep.subr.mxu0 0.0
  %496 = vmatpush1.msra.mxu0 0.0
  %497 = vmatprep.mubr.f32.mxu0 0.0
  %498 = vmatmul.mubr.f32.gmra.mrb[0].mxu0 %v429
  %v499 = vpop.f32.mrb[0].mxu0
  %v500 = vadd.f32 0.0, %v499
  %v501 = vpop.f32.mrb[0].mxu0
  %502 = vmatprep.mubr.f32.mxu0 0.0
  %503 = vmatmul.mubr.f32.gmra.mrb[0].mxu0 %v431
  %v504 = vpop.f32.mrb[0].mxu0
  %v505 = vadd.f32 0.0, %v504
  %v506 = vpop.f32.mrb[0].mxu0
  %507 = vdwg.mxu0
  %v508 = vadd.f32 %v421, %v500
  %v509 = vadd.f32 %v422, %v505
  %v510 = vxor.u32 %v508, 2147483648
  %v511 = vxor.u32 %v509, 2147483648
  %v512 = vmul.f32 %v510, 1.442695
  %v513 = vpow.pop %v512
  %v514 = vmul.f32 %v511, 1.442695
  %v515 = vpow.pop %v514
  %v516 = vadd.f32 %v513, 1.0
  %v517 = vadd.f32 %v515, 1.0
  %v518 = vrcp.pop %v516
  %v519 = vmul.f32 1.0, %v518
  %v520 = vrcp.pop %v517
  %v521 = vmul.f32 1.0, %v520
  %v522 = vtanh.pop %v508
  %v523 = vtanh.pop %v509
  %v524 = vmul.f32 %v519, %v419
  %v525 = vmul.f32 %v521, %v420
  %528 = vrot.lane.b32.xlu0 %v522, 64
  %v529 = vpop.permute.xlu0 %528
  %530 = vrot.lane.b32.xlu0 %v523, 64
  %v531 = vpop.permute.xlu0 %530
  %v534 = vmul.f32 %v519, %v529
  %v535 = vmul.f32 %v521, %v531
  %538 = vrot.lane.b32.xlu0 %v534, 32
  %v539 = vpop.permute.xlu0 %538
  %540 = vrot.lane.b32.xlu0 %v535, 32
  %v541 = vpop.permute.xlu0 %540
  %v544 = vadd.f32 %v524, %v539
  %v545 = vadd.f32 %v525, %v541
  %v546 = vtanh.pop %v544
  %v547 = vtanh.pop %v545
  %550 = vrot.lane.b32.xlu0 %v546, 64
  %v551 = vpop.permute.xlu0 %550
  %552 = vrot.lane.b32.xlu0 %v547, 64
  %v553 = vpop.permute.xlu0 %552
  %v556 = vmul.f32 %v519, %v551
  %v557 = vmul.f32 %v521, %v553
  %vm558 = vcmp.gt.s32.totalorder %v269, 1
  %vm559 = vcmp.gt.s32.totalorder %v270, 1
  %v560 = vsel %vm558, 1, 0
  %v561 = vsel %vm559, 1, 0
  %562 = vset.pattern.permute.xlu0 0
  %563 = vperm.xlu0 %562, %v560
  %v564 = vpop.permute.xlu0 %563
  %565 = vset.pattern.permute.xlu0 0
  %566 = vperm.xlu0 %565, %v561
  %v567 = vpop.permute.xlu0 %566
  %vm568 = vcmp.eq.s32.totalorder %v564, 1
  %vm569 = vcmp.eq.s32.totalorder %v567, 1
  %v570 = vsel %vm568, %v556, %v417
  %v571 = vsel %vm569, %v557, %v418
  %v572 = vsel %vm568, %v544, %v419
  %v573 = vsel %vm569, %v545, %v420
  %v574 = vld [vmem:[#allocation2 + $0x20] sm:$0xff]
  %v575 = vld [vmem:[#allocation2 + $0x28] sm:$0xff]
  %578 = vrot.lane.b32.xlu0 %v570, 32
  %v579 = vpop.permute.xlu0 %578
  %580 = vrot.lane.b32.xlu0 %v571, 32
  %v581 = vpop.permute.xlu0 %580
  %v582 = vsel %vm59, %v579, 0
  %v584 = vsel %vm59, %v581, 0
  %586 = vmatprep.subr.mxu0 0.0
  %587 = vmatpush1.msra.mxu0 %v271
  %588 = vmatprep.subr.mxu0 0.0
  %589 = vmatpush1.msra.mxu0 %v272
  %590 = vmatprep.subr.mxu0 0.0
  %591 = vmatpush1.msra.mxu0 %v273
  %592 = vmatprep.subr.mxu0 0.0
  %593 = vmatpush1.msra.mxu0 %v274
  %594 = vmatprep.subr.mxu0 0.0
  %595 = vmatpush1.msra.mxu0 0.0
  %596 = vmatprep.subr.mxu0 0.0
  %597 = vmatpush1.msra.mxu0 0.0
  %598 = vmatprep.subr.mxu0 0.0
  %599 = vmatpush1.msra.mxu0 0.0
  %600 = vmatprep.subr.mxu0 0.0
  %601 = vmatpush1.msra.mxu0 0.0
  %602 = vmatprep.subr.mxu0 0.0
  %603 = vmatpush1.msra.mxu0 0.0
  %604 = vmatprep.subr.mxu0 0.0
  %605 = vmatpush1.msra.mxu0 0.0
  %606 = vmatprep.subr.mxu0 0.0
  %607 = vmatpush1.msra.mxu0 0.0
  %608 = vmatprep.subr.mxu0 0.0
  %609 = vmatpush1.msra.mxu0 0.0
  %610 = vmatprep.subr.mxu0 0.0
  %611 = vmatpush1.msra.mxu0 0.0
  %612 = vmatprep.subr.mxu0 0.0
  %613 = vmatpush1.msra.mxu0 0.0
  %614 = vmatprep.subr.mxu0 0.0
  %615 = vmatpush1.msra.mxu0 0.0
  %616 = vmatprep.subr.mxu0 0.0
  %617 = vmatpush1.msra.mxu0 0.0
  %618 = vmatprep.subr.mxu0 0.0
  %619 = vmatpush1.msra.mxu0 0.0
  %620 = vmatprep.subr.mxu0 0.0
  %621 = vmatpush1.msra.mxu0 0.0
  %622 = vmatprep.subr.mxu0 0.0
  %623 = vmatpush1.msra.mxu0 0.0
  %624 = vmatprep.subr.mxu0 0.0
  %625 = vmatpush1.msra.mxu0 0.0
  %626 = vmatprep.subr.mxu0 0.0
  %627 = vmatpush1.msra.mxu0 0.0
  %628 = vmatprep.subr.mxu0 0.0
  %629 = vmatpush1.msra.mxu0 0.0
  %630 = vmatprep.subr.mxu0 0.0
  %631 = vmatpush1.msra.mxu0 0.0
  %632 = vmatprep.subr.mxu0 0.0
  %633 = vmatpush1.msra.mxu0 0.0
  %634 = vmatprep.subr.mxu0 0.0
  %635 = vmatpush1.msra.mxu0 0.0
  %636 = vmatprep.subr.mxu0 0.0
  %637 = vmatpush1.msra.mxu0 0.0
  %638 = vmatprep.subr.mxu0 0.0
  %639 = vmatpush1.msra.mxu0 0.0
  %640 = vmatprep.subr.mxu0 0.0
  %641 = vmatpush1.msra.mxu0 0.0
  %642 = vmatprep.subr.mxu0 0.0
  %643 = vmatpush1.msra.mxu0 0.0
  %644 = vmatprep.subr.mxu0 0.0
  %645 = vmatpush1.msra.mxu0 0.0
  %646 = vmatprep.subr.mxu0 0.0
  %647 = vmatpush1.msra.mxu0 0.0
  %648 = vmatprep.subr.mxu0 0.0
  %649 = vmatpush1.msra.mxu0 0.0
  %650 = vmatprep.mubr.f32.mxu0 0.0
  %651 = vmatmul.mubr.f32.gmra.mrb[0].mxu0 %v582
  %v652 = vpop.f32.mrb[0].mxu0
  %v653 = vadd.f32 0.0, %v652
  %v654 = vpop.f32.mrb[0].mxu0
  %655 = vmatprep.mubr.f32.mxu0 0.0
  %656 = vmatmul.mubr.f32.gmra.mrb[0].mxu0 %v584
  %v657 = vpop.f32.mrb[0].mxu0
  %v658 = vadd.f32 0.0, %v657
  %v659 = vpop.f32.mrb[0].mxu0
  %660 = vdwg.mxu0
  %v661 = vadd.f32 %v574, %v653
  %v662 = vadd.f32 %v575, %v658
  %v663 = vxor.u32 %v661, 2147483648
  %v664 = vxor.u32 %v662, 2147483648
  %v665 = vmul.f32 %v663, 1.442695
  %v666 = vpow.pop %v665
  %v667 = vmul.f32 %v664, 1.442695
  %v668 = vpow.pop %v667
  %v669 = vadd.f32 %v666, 1.0
  %v670 = vadd.f32 %v668, 1.0
  %v671 = vrcp.pop %v669
  %v672 = vmul.f32 1.0, %v671
  %v673 = vrcp.pop %v670
  %v674 = vmul.f32 1.0, %v673
  %v675 = vtanh.pop %v661
  %v676 = vtanh.pop %v662
  %v677 = vmul.f32 %v672, %v572
  %v678 = vmul.f32 %v674, %v573
  %681 = vrot.lane.b32.xlu0 %v675, 64
  %v682 = vpop.permute.xlu0 %681
  %683 = vrot.lane.b32.xlu0 %v676, 64
  %v684 = vpop.permute.xlu0 %683
  %v687 = vmul.f32 %v672, %v682
  %v688 = vmul.f32 %v674, %v684
  %691 = vrot.lane.b32.xlu0 %v687, 32
  %v692 = vpop.permute.xlu0 %691
  %693 = vrot.lane.b32.xlu0 %v688, 32
  %v694 = vpop.permute.xlu0 %693
  %v697 = vadd.f32 %v677, %v692
  %v698 = vadd.f32 %v678, %v694
  %v699 = vtanh.pop %v697
  %v700 = vtanh.pop %v698
  %703 = vrot.lane.b32.xlu0 %v699, 64
  %v704 = vpop.permute.xlu0 %703
  %705 = vrot.lane.b32.xlu0 %v700, 64
  %v706 = vpop.permute.xlu0 %705
  %v709 = vmul.f32 %v672, %v704
  %v710 = vmul.f32 %v674, %v706
  %vm711 = vcmp.gt.s32.totalorder %v269, 2
  %vm712 = vcmp.gt.s32.totalorder %v270, 2
  %v713 = vsel %vm711, 1, 0
  %v714 = vsel %vm712, 1, 0
  %715 = vset.pattern.permute.xlu0 0
  %716 = vperm.xlu0 %715, %v713
  %v717 = vpop.permute.xlu0 %716
  %718 = vset.pattern.permute.xlu0 0
  %719 = vperm.xlu0 %718, %v714
  %v720 = vpop.permute.xlu0 %719
  %vm721 = vcmp.eq.s32.totalorder %v717, 1
  %vm722 = vcmp.eq.s32.totalorder %v720, 1
  %v723 = vsel %vm721, %v709, %v570
  %v724 = vsel %vm722, %v710, %v571
  %v725 = vsel %vm721, %v697, %v572
  %v726 = vsel %vm722, %v698, %v573
  %v727 = vld [vmem:[#allocation2 + $0x30] sm:$0xff]
  %v728 = vld [vmem:[#allocation2 + $0x38] sm:$0xff]
  %731 = vrot.lane.b32.xlu0 %v723, 32
  %v732 = vpop.permute.xlu0 %731
  %733 = vrot.lane.b32.xlu0 %v724, 32
  %v734 = vpop.permute.xlu0 %733
  %v735 = vsel %vm59, %v732, 0
  %v737 = vsel %vm59, %v734, 0
  %739 = vmatprep.subr.mxu0 0.0
  %740 = vmatpush1.msra.mxu0 %v271
  %741 = vmatprep.subr.mxu0 0.0
  %742 = vmatpush1.msra.mxu0 %v272
  %743 = vmatprep.subr.mxu0 0.0
  %744 = vmatpush1.msra.mxu0 %v273
  %745 = vmatprep.subr.mxu0 0.0
  %746 = vmatpush1.msra.mxu0 %v274
  %747 = vmatprep.subr.mxu0 0.0
  %748 = vmatpush1.msra.mxu0 0.0
  %749 = vmatprep.subr.mxu0 0.0
  %750 = vmatpush1.msra.mxu0 0.0
  %751 = vmatprep.subr.mxu0 0.0
  %752 = vmatpush1.msra.mxu0 0.0
  %753 = vmatprep.subr.mxu0 0.0
  %754 = vmatpush1.msra.mxu0 0.0
  %755 = vmatprep.subr.mxu0 0.0
  %756 = vmatpush1.msra.mxu0 0.0
  %757 = vmatprep.subr.mxu0 0.0
  %758 = vmatpush1.msra.mxu0 0.0
  %759 = vmatprep.subr.mxu0 0.0
  %760 = vmatpush1.msra.mxu0 0.0
  %761 = vmatprep.subr.mxu0 0.0
  %762 = vmatpush1.msra.mxu0 0.0
  %763 = vmatprep.subr.mxu0 0.0
  %764 = vmatpush1.msra.mxu0 0.0
  %765 = vmatprep.subr.mxu0 0.0
  %766 = vmatpush1.msra.mxu0 0.0
  %767 = vmatprep.subr.mxu0 0.0
  %768 = vmatpush1.msra.mxu0 0.0
  %769 = vmatprep.subr.mxu0 0.0
  %770 = vmatpush1.msra.mxu0 0.0
  %771 = vmatprep.subr.mxu0 0.0
  %772 = vmatpush1.msra.mxu0 0.0
  %773 = vmatprep.subr.mxu0 0.0
  %774 = vmatpush1.msra.mxu0 0.0
  %775 = vmatprep.subr.mxu0 0.0
  %776 = vmatpush1.msra.mxu0 0.0
  %777 = vmatprep.subr.mxu0 0.0
  %778 = vmatpush1.msra.mxu0 0.0
  %779 = vmatprep.subr.mxu0 0.0
  %780 = vmatpush1.msra.mxu0 0.0
  %781 = vmatprep.subr.mxu0 0.0
  %782 = vmatpush1.msra.mxu0 0.0
  %783 = vmatprep.subr.mxu0 0.0
  %784 = vmatpush1.msra.mxu0 0.0
  %785 = vmatprep.subr.mxu0 0.0
  %786 = vmatpush1.msra.mxu0 0.0
  %787 = vmatprep.subr.mxu0 0.0
  %788 = vmatpush1.msra.mxu0 0.0
  %789 = vmatprep.subr.mxu0 0.0
  %790 = vmatpush1.msra.mxu0 0.0
  %791 = vmatprep.subr.mxu0 0.0
  %792 = vmatpush1.msra.mxu0 0.0
  %793 = vmatprep.subr.mxu0 0.0
  %794 = vmatpush1.msra.mxu0 0.0
  %795 = vmatprep.subr.mxu0 0.0
  %796 = vmatpush1.msra.mxu0 0.0
  %797 = vmatprep.subr.mxu0 0.0
  %798 = vmatpush1.msra.mxu0 0.0
  %799 = vmatprep.subr.mxu0 0.0
  %800 = vmatpush1.msra.mxu0 0.0
  %801 = vmatprep.subr.mxu0 0.0
  %802 = vmatpush1.msra.mxu0 0.0
  %803 = vmatprep.mubr.f32.mxu0 0.0
  %804 = vmatmul.mubr.f32.gmra.mrb[0].mxu0 %v735
  %v805 = vpop.f32.mrb[0].mxu0
  %v806 = vadd.f32 0.0, %v805
  %v807 = vpop.f32.mrb[0].mxu0
  %808 = vmatprep.mubr.f32.mxu0 0.0
  %809 = vmatmul.mubr.f32.gmra.mrb[0].mxu0 %v737
  %v810 = vpop.f32.mrb[0].mxu0
  %v811 = vadd.f32 0.0, %v810
  %v812 = vpop.f32.mrb[0].mxu0
  %813 = vdwg.mxu0
  %v814 = vadd.f32 %v727, %v806
  %v815 = vadd.f32 %v728, %v811
  %v816 = vxor.u32 %v814, 2147483648
  %v817 = vxor.u32 %v815, 2147483648
  %v818 = vmul.f32 %v816, 1.442695
  %v819 = vpow.pop %v818
  %v820 = vmul.f32 %v817, 1.442695
  %v821 = vpow.pop %v820
  %v822 = vadd.f32 %v819, 1.0
  %v823 = vadd.f32 %v821, 1.0
  %v824 = vrcp.pop %v822
  %v825 = vmul.f32 1.0, %v824
  %v826 = vrcp.pop %v823
  %v827 = vmul.f32 1.0, %v826
  %v828 = vtanh.pop %v814
  %v829 = vtanh.pop %v815
  %v830 = vmul.f32 %v825, %v725
  %v831 = vmul.f32 %v827, %v726
  %834 = vrot.lane.b32.xlu0 %v828, 64
  %v835 = vpop.permute.xlu0 %834
  %836 = vrot.lane.b32.xlu0 %v829, 64
  %v837 = vpop.permute.xlu0 %836
  %v840 = vmul.f32 %v825, %v835
  %v841 = vmul.f32 %v827, %v837
  %844 = vrot.lane.b32.xlu0 %v840, 32
  %v845 = vpop.permute.xlu0 %844
  %846 = vrot.lane.b32.xlu0 %v841, 32
  %v847 = vpop.permute.xlu0 %846
  %v850 = vadd.f32 %v830, %v845
  %v851 = vadd.f32 %v831, %v847
  %v852 = vtanh.pop %v850
  %v853 = vtanh.pop %v851
  %856 = vrot.lane.b32.xlu0 %v852, 64
  %v857 = vpop.permute.xlu0 %856
  %858 = vrot.lane.b32.xlu0 %v853, 64
  %v859 = vpop.permute.xlu0 %858
  %v862 = vmul.f32 %v825, %v857
  %v863 = vmul.f32 %v827, %v859
  %vm864 = vcmp.gt.s32.totalorder %v269, 3
  %vm865 = vcmp.gt.s32.totalorder %v270, 3
  %v866 = vsel %vm864, 1, 0
  %v867 = vsel %vm865, 1, 0
  %868 = vset.pattern.permute.xlu0 0
  %869 = vperm.xlu0 %868, %v866
  %v870 = vpop.permute.xlu0 %869
  %871 = vset.pattern.permute.xlu0 0
  %872 = vperm.xlu0 %871, %v867
  %v873 = vpop.permute.xlu0 %872
  %vm874 = vcmp.eq.s32.totalorder %v870, 1
  %vm875 = vcmp.eq.s32.totalorder %v873, 1
  %v876 = vsel %vm874, %v862, %v723
  %v877 = vsel %vm875, %v863, %v724
  %v878 = vsel %vm874, %v850, %v725
  %v879 = vsel %vm875, %v851, %v726
  %v880 = vld [vmem:[#allocation2 + $0x40] sm:$0xff]
  %v881 = vld [vmem:[#allocation2 + $0x48] sm:$0xff]
  %884 = vrot.lane.b32.xlu0 %v876, 32
  %v885 = vpop.permute.xlu0 %884
  %886 = vrot.lane.b32.xlu0 %v877, 32
  %v887 = vpop.permute.xlu0 %886
  %v888 = vsel %vm59, %v885, 0
  %v890 = vsel %vm59, %v887, 0
  %892 = vmatprep.subr.mxu0 0.0
  %893 = vmatpush1.msra.mxu0 %v271
  %894 = vmatprep.subr.mxu0 0.0
  %895 = vmatpush1.msra.mxu0 %v272
  %896 = vmatprep.subr.mxu0 0.0
  %897 = vmatpush1.msra.mxu0 %v273
  %898 = vmatprep.subr.mxu0 0.0
  %899 = vmatpush1.msra.mxu0 %v274
  %900 = vmatprep.subr.mxu0 0.0
  %901 = vmatpush1.msra.mxu0 0.0
  %902 = vmatprep.subr.mxu0 0.0
  %903 = vmatpush1.msra.mxu0 0.0
  %904 = vmatprep.subr.mxu0 0.0
  %905 = vmatpush1.msra.mxu0 0.0
  %906 = vmatprep.subr.mxu0 0.0
  %907 = vmatpush1.msra.mxu0 0.0
  %908 = vmatprep.subr.mxu0 0.0
  %909 = vmatpush1.msra.mxu0 0.0
  %910 = vmatprep.subr.mxu0 0.0
  %911 = vmatpush1.msra.mxu0 0.0
  %912 = vmatprep.subr.mxu0 0.0
  %913 = vmatpush1.msra.mxu0 0.0
  %914 = vmatprep.subr.mxu0 0.0
  %915 = vmatpush1.msra.mxu0 0.0
  %916 = vmatprep.subr.mxu0 0.0
  %917 = vmatpush1.msra.mxu0 0.0
  %918 = vmatprep.subr.mxu0 0.0
  %919 = vmatpush1.msra.mxu0 0.0
  %920 = vmatprep.subr.mxu0 0.0
  %921 = vmatpush1.msra.mxu0 0.0
  %922 = vmatprep.subr.mxu0 0.0
  %923 = vmatpush1.msra.mxu0 0.0
  %924 = vmatprep.subr.mxu0 0.0
  %925 = vmatpush1.msra.mxu0 0.0
  %926 = vmatprep.subr.mxu0 0.0
  %927 = vmatpush1.msra.mxu0 0.0
  %928 = vmatprep.subr.mxu0 0.0
  %929 = vmatpush1.msra.mxu0 0.0
  %930 = vmatprep.subr.mxu0 0.0
  %931 = vmatpush1.msra.mxu0 0.0
  %932 = vmatprep.subr.mxu0 0.0
  %933 = vmatpush1.msra.mxu0 0.0
  %934 = vmatprep.subr.mxu0 0.0
  %935 = vmatpush1.msra.mxu0 0.0
  %936 = vmatprep.subr.mxu0 0.0
  %937 = vmatpush1.msra.mxu0 0.0
  %938 = vmatprep.subr.mxu0 0.0
  %939 = vmatpush1.msra.mxu0 0.0
  %940 = vmatprep.subr.mxu0 0.0
  %941 = vmatpush1.msra.mxu0 0.0
  %942 = vmatprep.subr.mxu0 0.0
  %943 = vmatpush1.msra.mxu0 0.0
  %944 = vmatprep.subr.mxu0 0.0
  %945 = vmatpush1.msra.mxu0 0.0
  %946 = vmatprep.subr.mxu0 0.0
  %947 = vmatpush1.msra.mxu0 0.0
  %948 = vmatprep.subr.mxu0 0.0
  %949 = vmatpush1.msra.mxu0 0.0
  %950 = vmatprep.subr.mxu0 0.0
  %951 = vmatpush1.msra.mxu0 0.0
  %952 = vmatprep.subr.mxu0 0.0
  %953 = vmatpush1.msra.mxu0 0.0
  %954 = vmatprep.subr.mxu0 0.0
  %955 = vmatpush1.msra.mxu0 0.0
  %956 = vmatprep.mubr.f32.mxu0 0.0
  %957 = vmatmul.mubr.f32.gmra.mrb[0].mxu0 %v888
  %v958 = vpop.f32.mrb[0].mxu0
  %v959 = vadd.f32 0.0, %v958
  %v960 = vpop.f32.mrb[0].mxu0
  %961 = vmatprep.mubr.f32.mxu0 0.0
  %962 = vmatmul.mubr.f32.gmra.mrb[0].mxu0 %v890
  %v963 = vpop.f32.mrb[0].mxu0
  %v964 = vadd.f32 0.0, %v963
  %v965 = vpop.f32.mrb[0].mxu0
  %966 = vdwg.mxu0
  %v967 = vadd.f32 %v880, %v959
  %v968 = vadd.f32 %v881, %v964
  %v969 = vxor.u32 %v967, 2147483648
  %v970 = vxor.u32 %v968, 2147483648
  %v971 = vmul.f32 %v969, 1.442695
  %v972 = vpow.pop %v971
  %v973 = vmul.f32 %v970, 1.442695
  %v974 = vpow.pop %v973
  %v975 = vadd.f32 %v972, 1.0
  %v976 = vadd.f32 %v974, 1.0
  %v977 = vrcp.pop %v975
  %v978 = vmul.f32 1.0, %v977
  %v979 = vrcp.pop %v976
  %v980 = vmul.f32 1.0, %v979
  %v981 = vtanh.pop %v967
  %v982 = vtanh.pop %v968
  %v983 = vmul.f32 %v978, %v878
  %v984 = vmul.f32 %v980, %v879
  %987 = vrot.lane.b32.xlu0 %v981, 64
  %v988 = vpop.permute.xlu0 %987
  %989 = vrot.lane.b32.xlu0 %v982, 64
  %v990 = vpop.permute.xlu0 %989
  %v993 = vmul.f32 %v978, %v988
  %v994 = vmul.f32 %v980, %v990
  %997 = vrot.lane.b32.xlu0 %v993, 32
  %v998 = vpop.permute.xlu0 %997
  %999 = vrot.lane.b32.xlu0 %v994, 32
  %v1000 = vpop.permute.xlu0 %999
  %v1003 = vadd.f32 %v983, %v998
  %v1004 = vadd.f32 %v984, %v1000
  %v1005 = vtanh.pop %v1003
  %v1006 = vtanh.pop %v1004
  %1009 = vrot.lane.b32.xlu0 %v1005, 64
  %v1010 = vpop.permute.xlu0 %1009
  %1011 = vrot.lane.b32.xlu0 %v1006, 64
  %v1012 = vpop.permute.xlu0 %1011
  %v1015 = vmul.f32 %v978, %v1010
  %v1016 = vmul.f32 %v980, %v1012
  %vm1017 = vcmp.gt.s32.totalorder %v269, 4
  %vm1018 = vcmp.gt.s32.totalorder %v270, 4
  %v1019 = vsel %vm1017, 1, 0
  %v1020 = vsel %vm1018, 1, 0
  %1021 = vset.pattern.permute.xlu0 0
  %1022 = vperm.xlu0 %1021, %v1019
  %v1023 = vpop.permute.xlu0 %1022
  %1024 = vset.pattern.permute.xlu0 0
  %1025 = vperm.xlu0 %1024, %v1020
  %v1026 = vpop.permute.xlu0 %1025
  %vm1027 = vcmp.eq.s32.totalorder %v1023, 1
  %vm1028 = vcmp.eq.s32.totalorder %v1026, 1
  %v1029 = vsel %vm1027, %v1015, %v876
  %v1030 = vsel %vm1028, %v1016, %v877
  %v1031 = vsel %vm1027, %v1003, %v878
  %v1032 = vsel %vm1028, %v1004, %v879
  %v1033 = vld [vmem:[#allocation2 + $0x50] sm:$0xff]
  %v1034 = vld [vmem:[#allocation2 + $0x58] sm:$0xff]
  %1037 = vrot.lane.b32.xlu0 %v1029, 32
  %v1038 = vpop.permute.xlu0 %1037
  %1039 = vrot.lane.b32.xlu0 %v1030, 32
  %v1040 = vpop.permute.xlu0 %1039
  %v1041 = vsel %vm59, %v1038, 0
  %v1043 = vsel %vm59, %v1040, 0
  %1045 = vmatprep.subr.mxu0 0.0
  %1046 = vmatpush1.msra.mxu0 %v271
  %1047 = vmatprep.subr.mxu0 0.0
  %1048 = vmatpush1.msra.mxu0 %v272
  %1049 = vmatprep.subr.mxu0 0.0
  %1050 = vmatpush1.msra.mxu0 %v273
  %1051 = vmatprep.subr.mxu0 0.0
  %1052 = vmatpush1.msra.mxu0 %v274
  %1053 = vmatprep.subr.mxu0 0.0
  %1054 = vmatpush1.msra.mxu0 0.0
  %1055 = vmatprep.subr.mxu0 0.0
  %1056 = vmatpush1.msra.mxu0 0.0
  %1057 = vmatprep.subr.mxu0 0.0
  %1058 = vmatpush1.msra.mxu0 0.0
  %1059 = vmatprep.subr.mxu0 0.0
  %1060 = vmatpush1.msra.mxu0 0.0
  %1061 = vmatprep.subr.mxu0 0.0
  %1062 = vmatpush1.msra.mxu0 0.0
  %1063 = vmatprep.subr.mxu0 0.0
  %1064 = vmatpush1.msra.mxu0 0.0
  %1065 = vmatprep.subr.mxu0 0.0
  %1066 = vmatpush1.msra.mxu0 0.0
  %1067 = vmatprep.subr.mxu0 0.0
  %1068 = vmatpush1.msra.mxu0 0.0
  %1069 = vmatprep.subr.mxu0 0.0
  %1070 = vmatpush1.msra.mxu0 0.0
  %1071 = vmatprep.subr.mxu0 0.0
  %1072 = vmatpush1.msra.mxu0 0.0
  %1073 = vmatprep.subr.mxu0 0.0
  %1074 = vmatpush1.msra.mxu0 0.0
  %1075 = vmatprep.subr.mxu0 0.0
  %1076 = vmatpush1.msra.mxu0 0.0
  %1077 = vmatprep.subr.mxu0 0.0
  %1078 = vmatpush1.msra.mxu0 0.0
  %1079 = vmatprep.subr.mxu0 0.0
  %1080 = vmatpush1.msra.mxu0 0.0
  %1081 = vmatprep.subr.mxu0 0.0
  %1082 = vmatpush1.msra.mxu0 0.0
  %1083 = vmatprep.subr.mxu0 0.0
  %1084 = vmatpush1.msra.mxu0 0.0
  %1085 = vmatprep.subr.mxu0 0.0
  %1086 = vmatpush1.msra.mxu0 0.0
  %1087 = vmatprep.subr.mxu0 0.0
  %1088 = vmatpush1.msra.mxu0 0.0
  %1089 = vmatprep.subr.mxu0 0.0
  %1090 = vmatpush1.msra.mxu0 0.0
  %1091 = vmatprep.subr.mxu0 0.0
  %1092 = vmatpush1.msra.mxu0 0.0
  %1093 = vmatprep.subr.mxu0 0.0
  %1094 = vmatpush1.msra.mxu0 0.0
  %1095 = vmatprep.subr.mxu0 0.0
  %1096 = vmatpush1.msra.mxu0 0.0
  %1097 = vmatprep.subr.mxu0 0.0
  %1098 = vmatpush1.msra.mxu0 0.0
  %1099 = vmatprep.subr.mxu0 0.0
  %1100 = vmatpush1.msra.mxu0 0.0
  %1101 = vmatprep.subr.mxu0 0.0
  %1102 = vmatpush1.msra.mxu0 0.0
  %1103 = vmatprep.subr.mxu0 0.0
  %1104 = vmatpush1.msra.mxu0 0.0
  %1105 = vmatprep.subr.mxu0 0.0
  %1106 = vmatpush1.msra.mxu0 0.0
  %1107 = vmatprep.subr.mxu0 0.0
  %1108 = vmatpush1.msra.mxu0 0.0
  %1109 = vmatprep.mubr.f32.mxu0 0.0
  %1110 = vmatmul.mubr.f32.gmra.mrb[0].mxu0 %v1041
  %v1111 = vpop.f32.mrb[0].mxu0
  %v1112 = vadd.f32 0.0, %v1111
  %v1113 = vpop.f32.mrb[0].mxu0
  %1114 = vmatprep.mubr.f32.mxu0 0.0
  %1115 = vmatmul.mubr.f32.gmra.mrb[0].mxu0 %v1043
  %v1116 = vpop.f32.mrb[0].mxu0
  %v1117 = vadd.f32 0.0, %v1116
  %v1118 = vpop.f32.mrb[0].mxu0
  %1119 = vdwg.mxu0
  %v1120 = vadd.f32 %v1033, %v1112
  %v1121 = vadd.f32 %v1034, %v1117
  %v1122 = vxor.u32 %v1120, 2147483648
  %v1123 = vxor.u32 %v1121, 2147483648
  %v1124 = vmul.f32 %v1122, 1.442695
  %v1125 = vpow.pop %v1124
  %v1126 = vmul.f32 %v1123, 1.442695
  %v1127 = vpow.pop %v1126
  %v1128 = vadd.f32 %v1125, 1.0
  %v1129 = vadd.f32 %v1127, 1.0
  %v1130 = vrcp.pop %v1128
  %v1131 = vmul.f32 1.0, %v1130
  %v1132 = vrcp.pop %v1129
  %v1133 = vmul.f32 1.0, %v1132
  %v1134 = vtanh.pop %v1120
  %v1135 = vtanh.pop %v1121
  %v1136 = vmul.f32 %v1131, %v1031
  %v1137 = vmul.f32 %v1133, %v1032
  %1140 = vrot.lane.b32.xlu0 %v1134, 64
  %v1141 = vpop.permute.xlu0 %1140
  %1142 = vrot.lane.b32.xlu0 %v1135, 64
  %v1143 = vpop.permute.xlu0 %1142
  %v1146 = vmul.f32 %v1131, %v1141
  %v1147 = vmul.f32 %v1133, %v1143
  %1150 = vrot.lane.b32.xlu0 %v1146, 32
  %v1151 = vpop.permute.xlu0 %1150
  %1152 = vrot.lane.b32.xlu0 %v1147, 32
  %v1153 = vpop.permute.xlu0 %1152
  %v1156 = vadd.f32 %v1136, %v1151
  %v1157 = vadd.f32 %v1137, %v1153
  %v1158 = vtanh.pop %v1156
  %v1159 = vtanh.pop %v1157
  %1162 = vrot.lane.b32.xlu0 %v1158, 64
  %v1163 = vpop.permute.xlu0 %1162
  %1164 = vrot.lane.b32.xlu0 %v1159, 64
  %v1165 = vpop.permute.xlu0 %1164
  %v1168 = vmul.f32 %v1131, %v1163
  %v1169 = vmul.f32 %v1133, %v1165
  %vm1170 = vcmp.gt.s32.totalorder %v269, 5
  %vm1171 = vcmp.gt.s32.totalorder %v270, 5
  %v1172 = vsel %vm1170, 1, 0
  %v1173 = vsel %vm1171, 1, 0
  %1174 = vset.pattern.permute.xlu0 0
  %1175 = vperm.xlu0 %1174, %v1172
  %v1176 = vpop.permute.xlu0 %1175
  %1177 = vset.pattern.permute.xlu0 0
  %1178 = vperm.xlu0 %1177, %v1173
  %v1179 = vpop.permute.xlu0 %1178
  %vm1180 = vcmp.eq.s32.totalorder %v1176, 1
  %vm1181 = vcmp.eq.s32.totalorder %v1179, 1
  %v1182 = vsel %vm1180, %v1168, %v1029
  %v1183 = vsel %vm1181, %v1169, %v1030
  %v1184 = vsel %vm1180, %v1156, %v1031
  %v1185 = vsel %vm1181, %v1157, %v1032
  %v1186 = vld [vmem:[#allocation2 + $0x60] sm:$0xff]
  %v1187 = vld [vmem:[#allocation2 + $0x68] sm:$0xff]
  %1190 = vrot.lane.b32.xlu0 %v1182, 32
  %v1191 = vpop.permute.xlu0 %1190
  %1192 = vrot.lane.b32.xlu0 %v1183, 32
  %v1193 = vpop.permute.xlu0 %1192
  %v1194 = vsel %vm59, %v1191, 0
  %v1196 = vsel %vm59, %v1193, 0
  %1198 = vmatprep.subr.mxu0 0.0
  %1199 = vmatpush1.msra.mxu0 %v271
  %1200 = vmatprep.subr.mxu0 0.0
  %1201 = vmatpush1.msra.mxu0 %v272
  %1202 = vmatprep.subr.mxu0 0.0
  %1203 = vmatpush1.msra.mxu0 %v273
  %1204 = vmatprep.subr.mxu0 0.0
  %1205 = vmatpush1.msra.mxu0 %v274
  %1206 = vmatprep.subr.mxu0 0.0
  %1207 = vmatpush1.msra.mxu0 0.0
  %1208 = vmatprep.subr.mxu0 0.0
  %1209 = vmatpush1.msra.mxu0 0.0
  %1210 = vmatprep.subr.mxu0 0.0
  %1211 = vmatpush1.msra.mxu0 0.0
  %1212 = vmatprep.subr.mxu0 0.0
  %1213 = vmatpush1.msra.mxu0 0.0
  %1214 = vmatprep.subr.mxu0 0.0
  %1215 = vmatpush1.msra.mxu0 0.0
  %1216 = vmatprep.subr.mxu0 0.0
  %1217 = vmatpush1.msra.mxu0 0.0
  %1218 = vmatprep.subr.mxu0 0.0
  %1219 = vmatpush1.msra.mxu0 0.0
  %1220 = vmatprep.subr.mxu0 0.0
  %1221 = vmatpush1.msra.mxu0 0.0
  %1222 = vmatprep.subr.mxu0 0.0
  %1223 = vmatpush1.msra.mxu0 0.0
  %1224 = vmatprep.subr.mxu0 0.0
  %1225 = vmatpush1.msra.mxu0 0.0
  %1226 = vmatprep.subr.mxu0 0.0
  %1227 = vmatpush1.msra.mxu0 0.0
  %1228 = vmatprep.subr.mxu0 0.0
  %1229 = vmatpush1.msra.mxu0 0.0
  %1230 = vmatprep.subr.mxu0 0.0
  %1231 = vmatpush1.msra.mxu0 0.0
  %1232 = vmatprep.subr.mxu0 0.0
  %1233 = vmatpush1.msra.mxu0 0.0
  %1234 = vmatprep.subr.mxu0 0.0
  %1235 = vmatpush1.msra.mxu0 0.0
  %1236 = vmatprep.subr.mxu0 0.0
  %1237 = vmatpush1.msra.mxu0 0.0
  %1238 = vmatprep.subr.mxu0 0.0
  %1239 = vmatpush1.msra.mxu0 0.0
  %1240 = vmatprep.subr.mxu0 0.0
  %1241 = vmatpush1.msra.mxu0 0.0
  %1242 = vmatprep.subr.mxu0 0.0
  %1243 = vmatpush1.msra.mxu0 0.0
  %1244 = vmatprep.subr.mxu0 0.0
  %1245 = vmatpush1.msra.mxu0 0.0
  %1246 = vmatprep.subr.mxu0 0.0
  %1247 = vmatpush1.msra.mxu0 0.0
  %1248 = vmatprep.subr.mxu0 0.0
  %1249 = vmatpush1.msra.mxu0 0.0
  %1250 = vmatprep.subr.mxu0 0.0
  %1251 = vmatpush1.msra.mxu0 0.0
  %1252 = vmatprep.subr.mxu0 0.0
  %1253 = vmatpush1.msra.mxu0 0.0
  %1254 = vmatprep.subr.mxu0 0.0
  %1255 = vmatpush1.msra.mxu0 0.0
  %1256 = vmatprep.subr.mxu0 0.0
  %1257 = vmatpush1.msra.mxu0 0.0
  %1258 = vmatprep.subr.mxu0 0.0
  %1259 = vmatpush1.msra.mxu0 0.0
  %1260 = vmatprep.subr.mxu0 0.0
  %1261 = vmatpush1.msra.mxu0 0.0
  %1262 = vmatprep.mubr.f32.mxu0 0.0
  %1263 = vmatmul.mubr.f32.gmra.mrb[0].mxu0 %v1194
  %v1264 = vpop.f32.mrb[0].mxu0
  %v1265 = vadd.f32 0.0, %v1264
  %v1266 = vpop.f32.mrb[0].mxu0
  %1267 = vmatprep.mubr.f32.mxu0 0.0
  %1268 = vmatmul.mubr.f32.gmra.mrb[0].mxu0 %v1196
  %v1269 = vpop.f32.mrb[0].mxu0
  %v1270 = vadd.f32 0.0, %v1269
  %v1271 = vpop.f32.mrb[0].mxu0
  %1272 = vdwg.mxu0
  %v1273 = vadd.f32 %v1186, %v1265
  %v1274 = vadd.f32 %v1187, %v1270
  %v1275 = vxor.u32 %v1273, 2147483648
  %v1276 = vxor.u32 %v1274, 2147483648
  %v1277 = vmul.f32 %v1275, 1.442695
  %v1278 = vpow.pop %v1277
  %v1279 = vmul.f32 %v1276, 1.442695
  %v1280 = vpow.pop %v1279
  %v1281 = vadd.f32 %v1278, 1.0
  %v1282 = vadd.f32 %v1280, 1.0
  %v1283 = vrcp.pop %v1281
  %v1284 = vmul.f32 1.0, %v1283
  %v1285 = vrcp.pop %v1282
  %v1286 = vmul.f32 1.0, %v1285
  %v1287 = vtanh.pop %v1273
  %v1288 = vtanh.pop %v1274
  %v1289 = vmul.f32 %v1284, %v1184
  %v1290 = vmul.f32 %v1286, %v1185
  %1293 = vrot.lane.b32.xlu0 %v1287, 64
  %v1294 = vpop.permute.xlu0 %1293
  %1295 = vrot.lane.b32.xlu0 %v1288, 64
  %v1296 = vpop.permute.xlu0 %1295
  %v1299 = vmul.f32 %v1284, %v1294
  %v1300 = vmul.f32 %v1286, %v1296
  %1303 = vrot.lane.b32.xlu0 %v1299, 32
  %v1304 = vpop.permute.xlu0 %1303
  %1305 = vrot.lane.b32.xlu0 %v1300, 32
  %v1306 = vpop.permute.xlu0 %1305
  %v1309 = vadd.f32 %v1289, %v1304
  %v1310 = vadd.f32 %v1290, %v1306
  %v1311 = vtanh.pop %v1309
  %v1312 = vtanh.pop %v1310
  %1315 = vrot.lane.b32.xlu0 %v1311, 64
  %v1316 = vpop.permute.xlu0 %1315
  %1317 = vrot.lane.b32.xlu0 %v1312, 64
  %v1318 = vpop.permute.xlu0 %1317
  %v1321 = vmul.f32 %v1284, %v1316
  %v1322 = vmul.f32 %v1286, %v1318
  %vm1323 = vcmp.gt.s32.totalorder %v269, 6
  %vm1324 = vcmp.gt.s32.totalorder %v270, 6
  %v1325 = vsel %vm1323, 1, 0
  %v1326 = vsel %vm1324, 1, 0
  %1327 = vset.pattern.permute.xlu0 0
  %1328 = vperm.xlu0 %1327, %v1325
  %v1329 = vpop.permute.xlu0 %1328
  %1330 = vset.pattern.permute.xlu0 0
  %1331 = vperm.xlu0 %1330, %v1326
  %v1332 = vpop.permute.xlu0 %1331
  %vm1333 = vcmp.eq.s32.totalorder %v1329, 1
  %vm1334 = vcmp.eq.s32.totalorder %v1332, 1
  %v1335 = vsel %vm1333, %v1321, %v1182
  %v1336 = vsel %vm1334, %v1322, %v1183
  %v1337 = vsel %vm1333, %v1309, %v1184
  %v1338 = vsel %vm1334, %v1310, %v1185
  %v1339 = vld [vmem:[#allocation2 + $0x70] sm:$0xff]
  %v1340 = vld [vmem:[#allocation2 + $0x78] sm:$0xff]
  %1343 = vrot.lane.b32.xlu0 %v1335, 32
  %v1344 = vpop.permute.xlu0 %1343
  %1345 = vrot.lane.b32.xlu0 %v1336, 32
  %v1346 = vpop.permute.xlu0 %1345
  %v1347 = vsel %vm59, %v1344, 0
  %v1349 = vsel %vm59, %v1346, 0
  %1351 = vmatprep.subr.mxu0 0.0
  %1352 = vmatpush1.msra.mxu0 %v271
  %1353 = vmatprep.subr.mxu0 0.0
  %1354 = vmatpush1.msra.mxu0 %v272
  %1355 = vmatprep.subr.mxu0 0.0
  %1356 = vmatpush1.msra.mxu0 %v273
  %1357 = vmatprep.subr.mxu0 0.0
  %1358 = vmatpush1.msra.mxu0 %v274
  %1359 = vmatprep.subr.mxu0 0.0
  %1360 = vmatpush1.msra.mxu0 0.0
  %1361 = vmatprep.subr.mxu0 0.0
  %1362 = vmatpush1.msra.mxu0 0.0
  %1363 = vmatprep.subr.mxu0 0.0
  %1364 = vmatpush1.msra.mxu0 0.0
  %1365 = vmatprep.subr.mxu0 0.0
  %1366 = vmatpush1.msra.mxu0 0.0
  %1367 = vmatprep.subr.mxu0 0.0
  %1368 = vmatpush1.msra.mxu0 0.0
  %1369 = vmatprep.subr.mxu0 0.0
  %1370 = vmatpush1.msra.mxu0 0.0
  %1371 = vmatprep.subr.mxu0 0.0
  %1372 = vmatpush1.msra.mxu0 0.0
  %1373 = vmatprep.subr.mxu0 0.0
  %1374 = vmatpush1.msra.mxu0 0.0
  %1375 = vmatprep.subr.mxu0 0.0
  %1376 = vmatpush1.msra.mxu0 0.0
  %1377 = vmatprep.subr.mxu0 0.0
  %1378 = vmatpush1.msra.mxu0 0.0
  %1379 = vmatprep.subr.mxu0 0.0
  %1380 = vmatpush1.msra.mxu0 0.0
  %1381 = vmatprep.subr.mxu0 0.0
  %1382 = vmatpush1.msra.mxu0 0.0
  %1383 = vmatprep.subr.mxu0 0.0
  %1384 = vmatpush1.msra.mxu0 0.0
  %1385 = vmatprep.subr.mxu0 0.0
  %1386 = vmatpush1.msra.mxu0 0.0
  %1387 = vmatprep.subr.mxu0 0.0
  %1388 = vmatpush1.msra.mxu0 0.0
  %1389 = vmatprep.subr.mxu0 0.0
  %1390 = vmatpush1.msra.mxu0 0.0
  %1391 = vmatprep.subr.mxu0 0.0
  %1392 = vmatpush1.msra.mxu0 0.0
  %1393 = vmatprep.subr.mxu0 0.0
  %1394 = vmatpush1.msra.mxu0 0.0
  %1395 = vmatprep.subr.mxu0 0.0
  %1396 = vmatpush1.msra.mxu0 0.0
  %1397 = vmatprep.subr.mxu0 0.0
  %1398 = vmatpush1.msra.mxu0 0.0
  %1399 = vmatprep.subr.mxu0 0.0
  %1400 = vmatpush1.msra.mxu0 0.0
  %1401 = vmatprep.subr.mxu0 0.0
  %1402 = vmatpush1.msra.mxu0 0.0
  %1403 = vmatprep.subr.mxu0 0.0
  %1404 = vmatpush1.msra.mxu0 0.0
  %1405 = vmatprep.subr.mxu0 0.0
  %1406 = vmatpush1.msra.mxu0 0.0
  %1407 = vmatprep.subr.mxu0 0.0
  %1408 = vmatpush1.msra.mxu0 0.0
  %1409 = vmatprep.subr.mxu0 0.0
  %1410 = vmatpush1.msra.mxu0 0.0
  %1411 = vmatprep.subr.mxu0 0.0
  %1412 = vmatpush1.msra.mxu0 0.0
  %1413 = vmatprep.subr.mxu0 0.0
  %1414 = vmatpush1.msra.mxu0 0.0
  %1415 = vmatprep.mubr.f32.mxu0 0.0
  %1416 = vmatmul.mubr.f32.gmra.mrb[0].mxu0 %v1347
  %v1417 = vpop.f32.mrb[0].mxu0
  %v1418 = vadd.f32 0.0, %v1417
  %v1419 = vpop.f32.mrb[0].mxu0
  %1420 = vmatprep.mubr.f32.mxu0 0.0
  %1421 = vmatmul.mubr.f32.gmra.mrb[0].mxu0 %v1349
  %v1422 = vpop.f32.mrb[0].mxu0
  %v1423 = vadd.f32 0.0, %v1422
  %v1424 = vpop.f32.mrb[0].mxu0
  %1425 = vdwg.mxu0
  %v1426 = vadd.f32 %v1339, %v1418
  %v1427 = vadd.f32 %v1340, %v1423
  %v1428 = vxor.u32 %v1426, 2147483648
  %v1429 = vxor.u32 %v1427, 2147483648
  %v1430 = vmul.f32 %v1428, 1.442695
  %v1431 = vpow.pop %v1430
  %v1432 = vmul.f32 %v1429, 1.442695
  %v1433 = vpow.pop %v1432
  %v1434 = vadd.f32 %v1431, 1.0
  %v1435 = vadd.f32 %v1433, 1.0
  %v1436 = vrcp.pop %v1434
  %v1437 = vmul.f32 1.0, %v1436
  %v1438 = vrcp.pop %v1435
  %v1439 = vmul.f32 1.0, %v1438
  %v1440 = vtanh.pop %v1426
  %v1441 = vtanh.pop %v1427
  %v1442 = vmul.f32 %v1437, %v1337
  %v1443 = vmul.f32 %v1439, %v1338
  %1446 = vrot.lane.b32.xlu0 %v1440, 64
  %v1447 = vpop.permute.xlu0 %1446
  %1448 = vrot.lane.b32.xlu0 %v1441, 64
  %v1449 = vpop.permute.xlu0 %1448
  %v1452 = vmul.f32 %v1437, %v1447
  %v1453 = vmul.f32 %v1439, %v1449
  %1456 = vrot.lane.b32.xlu0 %v1452, 32
  %v1457 = vpop.permute.xlu0 %1456
  %1458 = vrot.lane.b32.xlu0 %v1453, 32
  %v1459 = vpop.permute.xlu0 %1458
  %v1462 = vadd.f32 %v1442, %v1457
  %v1463 = vadd.f32 %v1443, %v1459
  %v1464 = vtanh.pop %v1462
  %v1465 = vtanh.pop %v1463
  %1468 = vrot.lane.b32.xlu0 %v1464, 64
  %v1469 = vpop.permute.xlu0 %1468
  %1470 = vrot.lane.b32.xlu0 %v1465, 64
  %v1471 = vpop.permute.xlu0 %1470
  %v1474 = vmul.f32 %v1437, %v1469
  %v1475 = vmul.f32 %v1439, %v1471
  %vm1476 = vcmp.gt.s32.totalorder %v269, 7
  %vm1477 = vcmp.gt.s32.totalorder %v270, 7
  %v1478 = vsel %vm1476, 1, 0
  %v1479 = vsel %vm1477, 1, 0
  %1480 = vset.pattern.permute.xlu0 0
  %1481 = vperm.xlu0 %1480, %v1478
  %v1482 = vpop.permute.xlu0 %1481
  %1483 = vset.pattern.permute.xlu0 0
  %1484 = vperm.xlu0 %1483, %v1479
  %v1485 = vpop.permute.xlu0 %1484
  %vm1486 = vcmp.eq.s32.totalorder %v1482, 1
  %vm1487 = vcmp.eq.s32.totalorder %v1485, 1
  %v1488 = vsel %vm1486, %v1474, %v1335
  %v1489 = vsel %vm1487, %v1475, %v1336
  %1491 = vrot.lane.b32.xlu0 %v1488, 32
  %v1492 = vpop.permute.xlu0 %1491
  %1494 = vst.msk [vmem:[#allocation3] sm:$0xff] %vm59, %v1492
  %1496 = vrot.lane.b32.xlu0 %v1489, 64
  %v1497 = vpop.permute.xlu0 %1496
  %vm1499 = vcmask 523520
  %1500 = vst.msk [vmem:[#allocation3] sm:$0xff] %vm1499, %v1497
  %v1501 = vsub.f32 %v1488, %v1489
  %1503 = vrot.lane.b32.xlu0 %v1501, 96
  %v1504 = vpop.permute.xlu0 %1503
  %vm1506 = vcmask 785920
  %1507 = vst.msk [vmem:[#allocation3] sm:$0xff] %vm1506, %v1504
  %v1508 = vmul.f32 %v1488, %v1489
  %vm1509 = vcmask 1048320
  %1510 = vst.msk [vmem:[#allocation3] sm:$0xff] %vm1509, %v1508
  %v1511 = vld [vmem:[#allocation3] sm:$0xff]
  %v1512 = vld [vmem:[%s5] sm:$0xff]
  %v1513 = vld [vmem:[%s5 + $0x8] sm:$0xff]
  %v1514 = vld [vmem:[%s5 + $0x10] sm:$0xff]
  %v1515 = vld [vmem:[%s5 + $0x18] sm:$0xff]
  %v1516 = vld [vmem:[%s5 + $0x20] sm:$0xff]
  %v1517 = vld [vmem:[%s5 + $0x28] sm:$0xff]
  %v1518 = vld [vmem:[%s5 + $0x30] sm:$0xff]
  %v1519 = vld [vmem:[%s5 + $0x38] sm:$0xff]
  %v1520 = vld [vmem:[%s5 + $0x40] sm:$0xff]
  %v1521 = vld [vmem:[%s5 + $0x48] sm:$0xff]
  %v1522 = vld [vmem:[%s5 + $0x50] sm:$0xff]
  %v1523 = vld [vmem:[%s5 + $0x58] sm:$0xff]
  %v1524 = vld [vmem:[%s5 + $0x60] sm:$0xff]
  %v1525 = vld [vmem:[%s5 + $0x68] sm:$0xff]
  %v1526 = vld [vmem:[%s5 + $0x70] sm:$0xff]
  %v1527 = vld [vmem:[%s5 + $0x78] sm:$0xff]
  %v1528 = vld [vmem:[%s6] sm:$0x1]
  %v1530 = vlaneseq
  %v1531 = vshrl.u32 %v1530, 7
  %v1532 = vsub.s32 0, %v1531
  %v1533 = vrot.slane %v1528, %v1532
  %1535 = vmatprep.subr.mxu0 0.0
  %1536 = vmatpush1.msra.mxu0 %v1512
  %1537 = vmatprep.subr.mxu0 0.0
  %1538 = vmatpush1.msra.mxu0 %v1513
  %1539 = vmatprep.subr.mxu0 0.0
  %1540 = vmatpush1.msra.mxu0 %v1514
  %1541 = vmatprep.subr.mxu0 0.0
  %1542 = vmatpush1.msra.mxu0 %v1515
  %1543 = vmatprep.subr.mxu0 0.0
  %1544 = vmatpush1.msra.mxu0 %v1516
  %1545 = vmatprep.subr.mxu0 0.0
  %1546 = vmatpush1.msra.mxu0 %v1517
  %1547 = vmatprep.subr.mxu0 0.0
  %1548 = vmatpush1.msra.mxu0 %v1518
  %1549 = vmatprep.subr.mxu0 0.0
  %1550 = vmatpush1.msra.mxu0 %v1519
  %1551 = vmatprep.subr.mxu0 0.0
  %1552 = vmatpush1.msra.mxu0 %v1520
  %1553 = vmatprep.subr.mxu0 0.0
  %1554 = vmatpush1.msra.mxu0 %v1521
  %1555 = vmatprep.subr.mxu0 0.0
  %1556 = vmatpush1.msra.mxu0 %v1522
  %1557 = vmatprep.subr.mxu0 0.0
  %1558 = vmatpush1.msra.mxu0 %v1523
  %1559 = vmatprep.subr.mxu0 0.0
  %1560 = vmatpush1.msra.mxu0 %v1524
  %1561 = vmatprep.subr.mxu0 0.0
  %1562 = vmatpush1.msra.mxu0 %v1525
  %1563 = vmatprep.subr.mxu0 0.0
  %1564 = vmatpush1.msra.mxu0 %v1526
  %1565 = vmatprep.subr.mxu0 0.0
  %1566 = vmatpush1.msra.mxu0 %v1527
  %1567 = vmatprep.subr.mxu0 0.0
  %1568 = vmatpush1.msra.mxu0 0.0
  %1569 = vmatprep.subr.mxu0 0.0
  %1570 = vmatpush1.msra.mxu0 0.0
  %1571 = vmatprep.subr.mxu0 0.0
  %1572 = vmatpush1.msra.mxu0 0.0
  %1573 = vmatprep.subr.mxu0 0.0
  %1574 = vmatpush1.msra.mxu0 0.0
  %1575 = vmatprep.subr.mxu0 0.0
  %1576 = vmatpush1.msra.mxu0 0.0
  %1577 = vmatprep.subr.mxu0 0.0
  %1578 = vmatpush1.msra.mxu0 0.0
  %1579 = vmatprep.subr.mxu0 0.0
  %1580 = vmatpush1.msra.mxu0 0.0
  %1581 = vmatprep.subr.mxu0 0.0
  %1582 = vmatpush1.msra.mxu0 0.0
  %1583 = vmatprep.subr.mxu0 0.0
  %1584 = vmatpush1.msra.mxu0 0.0
  %1585 = vmatprep.subr.mxu0 0.0
  %1586 = vmatpush1.msra.mxu0 0.0
  %1587 = vmatprep.subr.mxu0 0.0
  %1588 = vmatpush1.msra.mxu0 0.0
  %1589 = vmatprep.subr.mxu0 0.0
  %1590 = vmatpush1.msra.mxu0 0.0
  %1591 = vmatprep.subr.mxu0 0.0
  %1592 = vmatpush1.msra.mxu0 0.0
  %1593 = vmatprep.subr.mxu0 0.0
  %1594 = vmatpush1.msra.mxu0 0.0
  %1595 = vmatprep.subr.mxu0 0.0
  %1596 = vmatpush1.msra.mxu0 0.0
  %1597 = vmatprep.subr.mxu0 0.0
  %1598 = vmatpush1.msra.mxu0 0.0
  %1599 = vmatprep.mubr.f32.mxu0 0.0
  %1600 = vmatmul.mubr.f32.gmra.mrb[0].mxu0 %v1511
  %v1601 = vpop.f32.mrb[0].mxu0
  %v1602 = vadd.f32 %v1533, %v1601
  %v1603 = vpop.f32.mrb[0].mxu0
  %1604 = vdwg.mxu0
  %v1605 = vtanh.pop %v1602
  %v1606 = vld [vmem:[%s7] sm:$0xff]
  %v1607 = vld [vmem:[%s7 + $0x8] sm:$0xff]
  %v1608 = vld [vmem:[%s7 + $0x10] sm:$0xff]
  %v1609 = vld [vmem:[%s7 + $0x18] sm:$0xff]
  %v1610 = vld [vmem:[%s8] sm:$0x1]
  %v1612 = vlaneseq
  %v1613 = vshrl.u32 %v1612, 7
  %v1614 = vsub.s32 0, %v1613
  %v1615 = vrot.slane %v1610, %v1614
  %v1618 = vsel %vm59, %v1605, 0
  %1620 = vmatprep.subr.mxu0 0.0
  %1621 = vmatpush1.msra.mxu0 %v1606
  %1622 = vmatprep.subr.mxu0 0.0
  %1623 = vmatpush1.msra.mxu0 %v1607
  %1624 = vmatprep.subr.mxu0 0.0
  %1625 = vmatpush1.msra.mxu0 %v1608
  %1626 = vmatprep.subr.mxu0 0.0
  %1627 = vmatpush1.msra.mxu0 %v1609
  %1628 = vmatprep.subr.mxu0 0.0
  %1629 = vmatpush1.msra.mxu0 0.0
  %1630 = vmatprep.subr.mxu0 0.0
  %1631 = vmatpush1.msra.mxu0 0.0
  %1632 = vmatprep.subr.mxu0 0.0
  %1633 = vmatpush1.msra.mxu0 0.0
  %1634 = vmatprep.subr.mxu0 0.0
  %1635 = vmatpush1.msra.mxu0 0.0
  %1636 = vmatprep.subr.mxu0 0.0
  %1637 = vmatpush1.msra.mxu0 0.0
  %1638 = vmatprep.subr.mxu0 0.0
  %1639 = vmatpush1.msra.mxu0 0.0
  %1640 = vmatprep.subr.mxu0 0.0
  %1641 = vmatpush1.msra.mxu0 0.0
  %1642 = vmatprep.subr.mxu0 0.0
  %1643 = vmatpush1.msra.mxu0 0.0
  %1644 = vmatprep.subr.mxu0 0.0
  %1645 = vmatpush1.msra.mxu0 0.0
  %1646 = vmatprep.subr.mxu0 0.0
  %1647 = vmatpush1.msra.mxu0 0.0
  %1648 = vmatprep.subr.mxu0 0.0
  %1649 = vmatpush1.msra.mxu0 0.0
  %1650 = vmatprep.subr.mxu0 0.0
  %1651 = vmatpush1.msra.mxu0 0.0
  %1652 = vmatprep.subr.mxu0 0.0
  %1653 = vmatpush1.msra.mxu0 0.0
  %1654 = vmatprep.subr.mxu0 0.0
  %1655 = vmatpush1.msra.mxu0 0.0
  %1656 = vmatprep.subr.mxu0 0.0
  %1657 = vmatpush1.msra.mxu0 0.0
  %1658 = vmatprep.subr.mxu0 0.0
  %1659 = vmatpush1.msra.mxu0 0.0
  %1660 = vmatprep.subr.mxu0 0.0
  %1661 = vmatpush1.msra.mxu0 0.0
  %1662 = vmatprep.subr.mxu0 0.0
  %1663 = vmatpush1.msra.mxu0 0.0
  %1664 = vmatprep.subr.mxu0 0.0
  %1665 = vmatpush1.msra.mxu0 0.0
  %1666 = vmatprep.subr.mxu0 0.0
  %1667 = vmatpush1.msra.mxu0 0.0
  %1668 = vmatprep.subr.mxu0 0.0
  %1669 = vmatpush1.msra.mxu0 0.0
  %1670 = vmatprep.subr.mxu0 0.0
  %1671 = vmatpush1.msra.mxu0 0.0
  %1672 = vmatprep.subr.mxu0 0.0
  %1673 = vmatpush1.msra.mxu0 0.0
  %1674 = vmatprep.subr.mxu0 0.0
  %1675 = vmatpush1.msra.mxu0 0.0
  %1676 = vmatprep.subr.mxu0 0.0
  %1677 = vmatpush1.msra.mxu0 0.0
  %1678 = vmatprep.subr.mxu0 0.0
  %1679 = vmatpush1.msra.mxu0 0.0
  %1680 = vmatprep.subr.mxu0 0.0
  %1681 = vmatpush1.msra.mxu0 0.0
  %1682 = vmatprep.subr.mxu0 0.0
  %1683 = vmatpush1.msra.mxu0 0.0
  %1684 = vmatprep.mubr.f32.mxu0 0.0
  %1685 = vmatmul.mubr.f32.gmra.mrb[0].mxu0 %v1618
  %v1686 = vpop.f32.mrb[0].mxu0
  %v1687 = vadd.f32 %v1615, %v1686
  %v1688 = vpop.f32.mrb[0].mxu0
  %1689 = vdwg.mxu0
  %vm1690 = vcmask 23552
  %1691 = vst.msk [vmem:[%s9] sm:$0xff] %vm1690, %v1687
  // Predicated region
  $region38: #{tpu_custom_call.1} parent=0 // pred_check
    _
  $region39: #{tpu_custom_call.1} parent=0 // pred_check_branch
    %1693 = sbr.rel (0) target = $region41
  $region40: #{tpu_custom_call.1} parent=0 // pred_region
    _
  $region41: #{tpu_custom_call.1} parent=0 // pred_fallthru
    _
  // Predicated region
  $region42: #{tpu_custom_call.1} parent=0 // pred_check
    _
  $region43: #{tpu_custom_call.1} parent=0 // pred_check_branch
    %1695 = sbr.rel (0) target = $region45
  $region44: #{tpu_custom_call.1} parent=0 // pred_region
    _
  $region45: #{tpu_custom_call.1} parent=0 // pred_fallthru
    _

</llo_original>
